<compile_context>
chip_gen: v6e
topology: v6e:2x2x1
jax: 0.10.0
libtpu: 0.0.40
codegen_flags: <defaults>
</compile_context>

<pallas_src>
import functools

import jax
import jax.numpy as jnp
from jax.experimental import pallas as pl
from jax.experimental.pallas import tpu as pltpu

_BIG = 1e30  # additive penalty for masked-out entries in min-reductions


def _point_loss_kernel(
    # inputs
    norm_ref,      # (1, 4) f32 SMEM: plane [a, b, c, d]
    nvalid_ref,    # (1, 1) i32 SMEM: true number of points N
    ncol_ref,      # (8, 1) f32 VMEM: [a, b, c, 0, 0, 0, 0, 0]^T
    rows_ref,      # (TM, 8) f32 VMEM: row tile of padded points (xyz + 5 zero cols)
    colsT_ref,     # (8, TN) f32 VMEM: column tile of transposed padded points
    # output
    out_ref,       # (1, 1) f32
    # scratch
    paug_ref,      # (TM, 8)   augmented LHS for the current row block
    m2f_ref,       # (TM, 1)   half2 membership (f32) for the current row block
    raug_ref,      # (8, Npad) augmented RHS, filled during the first row block
    rowmin_ref,    # (TM, 1)   running row-min for the current row block
    colmin_ref,    # (1, Npad) running col-min across row blocks
    sum1_ref, sum2_ref, cnt1_ref, cnt2_ref,
    sum_ps_ref, min_ps_ref, sum_rs_ref, min_rs_ref,   # (1, 1) accumulators
):
    j = pl.program_id(0)              # row block index (original points p)
    i = pl.program_id(1)              # column block index (reflected points r)
    nj = pl.num_programs(0)
    ni = pl.num_programs(1)
    TM = rows_ref.shape[0]
    TN = colsT_ref.shape[1]

    a0 = norm_ref[0, 0]
    a1 = norm_ref[0, 1]
    a2 = norm_ref[0, 2]
    dpl = norm_ref[0, 3]
    n_valid = nvalid_ref[0, 0]
    off = pl.multiple_of(i * TN, TN)

    # ---------------- once per kernel: zero the global accumulators ----------
    @pl.when(jnp.logical_and(j == 0, i == 0))
    def _init():
        zero = jnp.zeros((1, 1), jnp.float32)
        big = jnp.full((1, 1), _BIG, jnp.float32)
        sum1_ref[...] = zero
        sum2_ref[...] = zero
        cnt1_ref[...] = zero
        cnt2_ref[...] = zero
        sum_ps_ref[...] = zero
        min_ps_ref[...] = big
        sum_rs_ref[...] = zero
        min_rs_ref[...] = big

    # ------- once per row block (i == 0): augmented LHS + half2 statistics ----
    @pl.when(i == 0)
    def _row_block_setup():
        pr = rows_ref[...]                                   # (TM, 8); cols 3..7 zero
        x = pr[:, 0:1]
        y = pr[:, 1:2]
        z = pr[:, 2:3]
        # identical op order to the column-side computation -> identical masks
        dot_r = x * a0 + y * a1 + z * a2                     # (TM, 1)
        two_side_r = -2.0 * (dot_r + dpl)                    # (TM, 1)
        row_ids = j * TM + jax.lax.broadcasted_iota(jnp.int32, (TM, 1), 0)
        valid_r = row_ids < n_valid
        mask2 = jnp.logical_and(jnp.logical_not(two_side_r > 0.0), valid_r)
        m2f = mask2.astype(jnp.float32)
        pts_sq = x * x + y * y + z * z                       # (TM, 1)
        psq_pen2 = pts_sq + jnp.where(mask2, 0.0, _BIG)      # ||p||^2 + pen2
        lane = jax.lax.broadcasted_iota(jnp.int32, (TM, 8), 1)
        paug = jnp.where(lane == 3, psq_pen2, pr)            # col 3 = ||p||^2+pen2
        paug = jnp.where(lane == 4, 1.0, paug)               # col 4 = 1
        paug_ref[...] = paug
        m2f_ref[...] = m2f
        rowmin_ref[...] = jnp.full((TM, 1), _BIG, jnp.float32)
        # half2 statistics (counts + empty-half fallbacks)
        cnt2_ref[...] += jnp.sum(m2f, keepdims=True)
        sum_ps_ref[...] += jnp.sum(m2f * pts_sq, keepdims=True)
        min_ps_ref[...] = jnp.minimum(
            min_ps_ref[...], jnp.min(jnp.where(mask2, pts_sq, _BIG), keepdims=True))

    # --- during the first row block (j == 0): augmented RHS + half1 statistics ---
    @pl.when(j == 0)
    def _col_block_setup():
        pt = colsT_ref[...]                                  # (8, TN); rows 3..7 zero
        dot_c = a0 * pt[0:1, :] + a1 * pt[1:2, :] + a2 * pt[2:3, :]     # (1, TN)
        two_side_c = -2.0 * (dot_c + dpl)
        ncol = ncol_ref[...]                                 # (8, 1)
        nsq = jnp.sum(ncol * ncol, keepdims=True)            # (1, 1) = a^2+b^2+c^2
        inv_nsq = pl.reciprocal(nsq, approx=False)
        k_c = two_side_c * inv_nsq                           # (1, TN)
        refl = pt + k_c * ncol                               # (8, TN); pad rows stay 0
        rx = refl[0:1, :]
        ry = refl[1:2, :]
        rz = refl[2:3, :]
        ref_sq = rx * rx + ry * ry + rz * rz                 # (1, TN)
        col_ids = off + jax.lax.broadcasted_iota(jnp.int32, (1, TN), 1)
        valid_c = col_ids < n_valid
        mask1 = jnp.logical_and(two_side_c > 0.0, valid_c)
        ref_pen1 = ref_sq + jnp.where(mask1, 0.0, _BIG)      # ||r||^2 + pen1
        sub = jax.lax.broadcasted_iota(jnp.int32, (8, TN), 0)
        raug = jnp.where(sub < 3, -2.0 * refl, 0.0)          # rows 0..2 = -2*r
        raug = jnp.where(sub == 3, 1.0, raug)                # row 3 = 1
        raug = jnp.where(sub == 4, ref_pen1, raug)           # row 4 = ||r||^2+pen1
        raug_ref[:, pl.ds(off, TN)] = raug
        colmin_ref[:, pl.ds(off, TN)] = jnp.full((1, TN), _BIG, jnp.float32)
        # half1 statistics (counts + empty-half fallbacks)
        m1f = mask1.astype(jnp.float32)
        cnt1_ref[...] += jnp.sum(m1f, keepdims=True)
        sum_rs_ref[...] += jnp.sum(m1f * ref_sq, keepdims=True)
        min_rs_ref[...] = jnp.minimum(
            min_rs_ref[...], jnp.min(jnp.where(mask1, ref_sq, _BIG), keepdims=True))

    # ---- O(TM*TN) tile work: one MXU matmul + two streaming min-reductions ----
    paug = paug_ref[...]                                     # (TM, 8)
    raug = raug_ref[:, pl.ds(off, TN)]                       # (8, TN)
    # M[j, i] = ||p_j||^2 + pen2_j + ||r_i||^2 + pen1_i - 2 p_j . r_i
    M = jnp.dot(paug, raug, preferred_element_type=jnp.float32)   # (TM, TN)

    rowmin_ref[...] = jnp.minimum(rowmin_ref[...], jnp.min(M, axis=1, keepdims=True))
    cm = jnp.minimum(colmin_ref[:, pl.ds(off, TN)], jnp.min(M, axis=0, keepdims=True))
    colmin_ref[:, pl.ds(off, TN)] = cm

    # ---- row block finished (last column block): fold row-mins into sum1 ----
    @pl.when(i == ni - 1)
    def _finish_row_block():
        sum1_ref[...] += jnp.sum(m2f_ref[...] * rowmin_ref[...], keepdims=True)

    # ---- column block finished (last row block): fold col-mins into sum2 ----
    @pl.when(j == nj - 1)
    def _finish_col_block():
        pt = colsT_ref[...]
        dot_c = a0 * pt[0:1, :] + a1 * pt[1:2, :] + a2 * pt[2:3, :]
        two_side_c = -2.0 * (dot_c + dpl)
        col_ids = off + jax.lax.broadcasted_iota(jnp.int32, (1, TN), 1)
        mask1 = jnp.logical_and(two_side_c > 0.0, col_ids < n_valid)
        sum2_ref[...] += jnp.sum(jnp.where(mask1, cm, 0.0), keepdims=True)

    # ---- epilogue: chamfer means + empty-half fallbacks, scaled by 100 ----
    @pl.when(jnp.logical_and(j == nj - 1, i == ni - 1))
    def _epilogue():
        c1 = cnt1_ref[...]
        c2 = cnt2_ref[...]
        has1 = c1 > 0.0
        has2 = c2 > 0.0
        av1_num = jnp.where(has1, sum1_ref[...], sum_ps_ref[...])
        av1 = jnp.where(has2, av1_num / jnp.maximum(c2, 1.0), min_rs_ref[...])
        av2_num = jnp.where(has2, sum2_ref[...], sum_rs_ref[...])
        av2 = jnp.where(has1, av2_num / jnp.maximum(c1, 1.0), min_ps_ref[...])
        out_ref[...] = (0.5 * av1 + 0.5 * av2) * 100.0


@functools.partial(jax.jit, static_argnames=("tile",))
def point_loss(norm, points, *, tile=512):
    """PointLoss.forward(norm, points) -> scalar float32.

    norm: (1, 4) plane parameters [a, b, c, d]; points: (N, 3).
    `tile` (multiple of 128) sizes the (tile x tile) pairwise blocks; 512 fits
    comfortably in VMEM on v5e/v6e/v7x.
    """
    if tile % 128 != 0 or tile <= 0:
        raise ValueError("tile must be a positive multiple of 128")
    norm = jnp.asarray(norm, jnp.float32).reshape(1, 4)
    points = jnp.asarray(points, jnp.float32)
    n = points.shape[0]
    npad = max(((n + tile - 1) // tile) * tile, tile)
    nblk = npad // tile

    # host-side glue: pad point count to the tile and coords to 8 lanes; pad
    # points are excluded from both halves inside the kernel via the N scalar.
    pts_pad = jnp.zeros((npad, 8), jnp.float32).at[:n, :3].set(points)
    pts_t_pad = jnp.zeros((8, npad), jnp.float32).at[:3, :n].set(points.T)
    norm_col = jnp.zeros((8, 1), jnp.float32).at[:3, 0].set(norm[0, :3])
    nvalid = jnp.full((1, 1), n, jnp.int32)

    out = pl.pallas_call(
        _point_loss_kernel,
        out_shape=jax.ShapeDtypeStruct((1, 1), jnp.float32),
        grid=(nblk, nblk),
        in_specs=[
            pl.BlockSpec((1, 4), lambda j, i: (0, 0),
                         memory_space=pltpu.MemorySpace.SMEM),
            pl.BlockSpec((1, 1), lambda j, i: (0, 0),
                         memory_space=pltpu.MemorySpace.SMEM),
            pl.BlockSpec((8, 1), lambda j, i: (0, 0)),
            pl.BlockSpec((tile, 8), lambda j, i: (j, 0)),
            pl.BlockSpec((8, tile), lambda j, i: (0, i)),
        ],
        out_specs=pl.BlockSpec((1, 1), lambda j, i: (0, 0)),
        scratch_shapes=[
            pltpu.VMEM((tile, 8), jnp.float32),    # paug
            pltpu.VMEM((tile, 1), jnp.float32),    # m2f
            pltpu.VMEM((8, npad), jnp.float32),    # raug (all columns, cached)
            pltpu.VMEM((tile, 1), jnp.float32),    # rowmin
            pltpu.VMEM((1, npad), jnp.float32),    # colmin (all columns)
            pltpu.VMEM((1, 1), jnp.float32),       # sum1
            pltpu.VMEM((1, 1), jnp.float32),       # sum2
            pltpu.VMEM((1, 1), jnp.float32),       # cnt1
            pltpu.VMEM((1, 1), jnp.float32),       # cnt2
            pltpu.VMEM((1, 1), jnp.float32),       # sum pts_sq over half2
            pltpu.VMEM((1, 1), jnp.float32),       # min pts_sq over half2
            pltpu.VMEM((1, 1), jnp.float32),       # sum ref_sq over half1
            pltpu.VMEM((1, 1), jnp.float32),       # min ref_sq over half1
        ],
        compiler_params=pltpu.CompilerParams(
            # both axes sequential: the col-min accumulator spans row blocks,
            # so the grid cannot be megacore-sharded without a cross-core reduce.
            dimension_semantics=("arbitrary", "arbitrary"),
        ),
        cost_estimate=pl.CostEstimate(
            flops=int(18 * npad * npad),
            transcendentals=0,
            bytes_accessed=int(64 * npad + 128),
        ),
    )(norm, nvalid, norm_col, pts_pad, pts_t_pad)
    return out[0, 0]


if __name__ == "__main__":
    key = jax.random.PRNGKey(0)
    k_pts, k_norm = jax.random.split(key)
    n_points = 300  # deliberately not a tile multiple -> exercises padding masks
    points = jax.random.normal(k_pts, (n_points, 3), dtype=jnp.float32)
    norm = jax.random.normal(k_norm, (1, 4), dtype=jnp.float32)  # plane [a, b, c, d]

    # small tile so the demo runs a 3x3 grid and hits every accumulator path
    loss = point_loss(norm, points, tile=128)
    jax.block_until_ready(loss)
    print("KERNEL_OK")
</pallas_src>

<mosaic_0001>
module attributes {stable_mosaic.version = 11 : i64} {
  func.func @_point_loss_kernel(%arg0: i32, %arg1: i32, %arg2: memref<1x4xf32, #tpu.memory_space<smem>>, %arg3: memref<1x1xi32, #tpu.memory_space<smem>>, %arg4: memref<8x1xf32, #tpu.memory_space<vmem>>, %arg5: memref<128x8xf32, #tpu.memory_space<vmem>>, %arg6: memref<8x128xf32, #tpu.memory_space<vmem>>, %arg7: memref<1x1xf32, #tpu.memory_space<vmem>>, %arg8: memref<128x8xf32, #tpu.memory_space<vmem>>, %arg9: memref<128x1xf32, #tpu.memory_space<vmem>>, %arg10: memref<8x384xf32, #tpu.memory_space<vmem>>, %arg11: memref<128x1xf32, #tpu.memory_space<vmem>>, %arg12: memref<1x384xf32, #tpu.memory_space<vmem>>, %arg13: memref<1x1xf32, #tpu.memory_space<vmem>>, %arg14: memref<1x1xf32, #tpu.memory_space<vmem>>, %arg15: memref<1x1xf32, #tpu.memory_space<vmem>>, %arg16: memref<1x1xf32, #tpu.memory_space<vmem>>, %arg17: memref<1x1xf32, #tpu.memory_space<vmem>>, %arg18: memref<1x1xf32, #tpu.memory_space<vmem>>, %arg19: memref<1x1xf32, #tpu.memory_space<vmem>>, %arg20: memref<1x1xf32, #tpu.memory_space<vmem>>) attributes {dimension_semantics = [#tpu.dimension_semantics<arbitrary>, #tpu.dimension_semantics<arbitrary>], iteration_bounds = array<i64: 3, 3>, scalar_prefetch = 0 : i64, scratch_operands = 13 : i64, tpu.core_type = #tpu.core_type<tc>, window_params = [{transform_indices = @transform_0, window_bounds = array<i64: 1, 4>}, {transform_indices = @transform_1, window_bounds = array<i64: 1, 1>}, {pipeline_mode = #tpu.pipeline_mode<synchronous>, transform_indices = @transform_2, window_bounds = array<i64: 8, 1>}, {transform_indices = @transform_3, window_bounds = array<i64: 128, 8>}, {transform_indices = @transform_4, window_bounds = array<i64: 8, 128>}, {pipeline_mode = #tpu.pipeline_mode<synchronous>, transform_indices = @transform_5, window_bounds = array<i64: 1, 1>}]} {
    %c0 = arith.constant 0 : index
    %c0_0 = arith.constant 0 : index
    %0 = memref.load %arg2[%c0, %c0_0] : memref<1x4xf32, #tpu.memory_space<smem>>
    %c0_1 = arith.constant 0 : index
    %c1 = arith.constant 1 : index
    %1 = memref.load %arg2[%c0_1, %c1] : memref<1x4xf32, #tpu.memory_space<smem>>
    %c0_2 = arith.constant 0 : index
    %c2 = arith.constant 2 : index
    %2 = memref.load %arg2[%c0_2, %c2] : memref<1x4xf32, #tpu.memory_space<smem>>
    %c0_3 = arith.constant 0 : index
    %c3 = arith.constant 3 : index
    %3 = memref.load %arg2[%c0_3, %c3] : memref<1x4xf32, #tpu.memory_space<smem>>
    %c0_4 = arith.constant 0 : index
    %c0_5 = arith.constant 0 : index
    %4 = memref.load %arg3[%c0_4, %c0_5] : memref<1x1xi32, #tpu.memory_space<smem>>
    %c128_i32 = arith.constant 128 : i32
    %5 = arith.muli %arg1, %c128_i32 : i32
    %6 = tpu.assume_multiple %5, 128 : i32
    %c0_i32 = arith.constant 0 : i32
    %7 = arith.cmpi eq, %arg0, %c0_i32 : i32
    %c0_i32_6 = arith.constant 0 : i32
    %8 = arith.cmpi eq, %arg1, %c0_i32_6 : i32
    %9 = arith.andi %7, %8 : i1
    %10 = arith.extui %9 : i1 to i32
    %c0_i32_7 = arith.constant 0 : i32
    %11 = arith.cmpi ne, %10, %c0_i32_7 : i32
    scf.if %11 {
      %cst_29 = arith.constant 0.000000e+00 : f32
      %45 = vector.broadcast %cst_29 : f32 to vector<1x1xf32>
      %cst_30 = arith.constant 1.000000e+30 : f32
      %46 = vector.broadcast %cst_30 : f32 to vector<1x1xf32>
      %c0_31 = arith.constant 0 : index
      %c0_32 = arith.constant 0 : index
      %47 = vector.load %arg13[%c0_31, %c0_32] : memref<1x1xf32, #tpu.memory_space<vmem>>, vector<1x1xf32>
      tpu.vector_store %arg13[%c0_31, %c0_32], %45 {strides = array<i32>} : memref<1x1xf32, #tpu.memory_space<vmem>>, vector<1x1xf32>,
      %c0_33 = arith.constant 0 : index
      %c0_34 = arith.constant 0 : index
      %48 = vector.load %arg14[%c0_33, %c0_34] : memref<1x1xf32, #tpu.memory_space<vmem>>, vector<1x1xf32>
      tpu.vector_store %arg14[%c0_33, %c0_34], %45 {strides = array<i32>} : memref<1x1xf32, #tpu.memory_space<vmem>>, vector<1x1xf32>,
      %c0_35 = arith.constant 0 : index
      %c0_36 = arith.constant 0 : index
      %49 = vector.load %arg15[%c0_35, %c0_36] : memref<1x1xf32, #tpu.memory_space<vmem>>, vector<1x1xf32>
      tpu.vector_store %arg15[%c0_35, %c0_36], %45 {strides = array<i32>} : memref<1x1xf32, #tpu.memory_space<vmem>>, vector<1x1xf32>,
      %c0_37 = arith.constant 0 : index
      %c0_38 = arith.constant 0 : index
      %50 = vector.load %arg16[%c0_37, %c0_38] : memref<1x1xf32, #tpu.memory_space<vmem>>, vector<1x1xf32>
      tpu.vector_store %arg16[%c0_37, %c0_38], %45 {strides = array<i32>} : memref<1x1xf32, #tpu.memory_space<vmem>>, vector<1x1xf32>,
      %c0_39 = arith.constant 0 : index
      %c0_40 = arith.constant 0 : index
      %51 = vector.load %arg17[%c0_39, %c0_40] : memref<1x1xf32, #tpu.memory_space<vmem>>, vector<1x1xf32>
      tpu.vector_store %arg17[%c0_39, %c0_40], %45 {strides = array<i32>} : memref<1x1xf32, #tpu.memory_space<vmem>>, vector<1x1xf32>,
      %c0_41 = arith.constant 0 : index
      %c0_42 = arith.constant 0 : index
      %52 = vector.load %arg18[%c0_41, %c0_42] : memref<1x1xf32, #tpu.memory_space<vmem>>, vector<1x1xf32>
      tpu.vector_store %arg18[%c0_41, %c0_42], %46 {strides = array<i32>} : memref<1x1xf32, #tpu.memory_space<vmem>>, vector<1x1xf32>,
      %c0_43 = arith.constant 0 : index
      %c0_44 = arith.constant 0 : index
      %53 = vector.load %arg19[%c0_43, %c0_44] : memref<1x1xf32, #tpu.memory_space<vmem>>, vector<1x1xf32>
      tpu.vector_store %arg19[%c0_43, %c0_44], %45 {strides = array<i32>} : memref<1x1xf32, #tpu.memory_space<vmem>>, vector<1x1xf32>,
      %c0_45 = arith.constant 0 : index
      %c0_46 = arith.constant 0 : index
      %54 = vector.load %arg20[%c0_45, %c0_46] : memref<1x1xf32, #tpu.memory_space<vmem>>, vector<1x1xf32>
      tpu.vector_store %arg20[%c0_45, %c0_46], %46 {strides = array<i32>} : memref<1x1xf32, #tpu.memory_space<vmem>>, vector<1x1xf32>,
    } else {
    }
    %c0_i32_8 = arith.constant 0 : i32
    %12 = arith.cmpi eq, %arg1, %c0_i32_8 : i32
    %13 = arith.extui %12 : i1 to i32
    %c0_i32_9 = arith.constant 0 : i32
    %14 = arith.cmpi ne, %13, %c0_i32_9 : i32
    scf.if %14 {
      %c0_29 = arith.constant 0 : index
      %c0_30 = arith.constant 0 : index
      %45 = vector.load %arg5[%c0_29, %c0_30] : memref<128x8xf32, #tpu.memory_space<vmem>>, vector<128x8xf32>
      %46 = vector.extract_strided_slice %45 {offsets = [0, 0], sizes = [128, 1], strides = [1, 1]} : vector<128x8xf32> to vector<128x1xf32>
      %47 = vector.extract_strided_slice %45 {offsets = [0, 1], sizes = [128, 1], strides = [1, 1]} : vector<128x8xf32> to vector<128x1xf32>
      %48 = vector.extract_strided_slice %45 {offsets = [0, 2], sizes = [128, 1], strides = [1, 1]} : vector<128x8xf32> to vector<128x1xf32>
      %49 = vector.broadcast %0 : f32 to vector<128x1xf32>
      %50 = arith.mulf %46, %49 : vector<128x1xf32>
      %51 = vector.broadcast %1 : f32 to vector<128x1xf32>
      %52 = arith.mulf %47, %51 : vector<128x1xf32>
      %53 = arith.addf %50, %52 : vector<128x1xf32>
      %54 = vector.broadcast %2 : f32 to vector<128x1xf32>
      %55 = arith.mulf %48, %54 : vector<128x1xf32>
      %56 = arith.addf %53, %55 : vector<128x1xf32>
      %57 = vector.broadcast %3 : f32 to vector<128x1xf32>
      %58 = arith.addf %56, %57 : vector<128x1xf32>
      %cst_31 = arith.constant -2.000000e+00 : f32
      %59 = vector.broadcast %cst_31 : f32 to vector<128x1xf32>
      %60 = arith.mulf %59, %58 : vector<128x1xf32>
      %c128_i32_32 = arith.constant 128 : i32
      %61 = arith.muli %arg0, %c128_i32_32 : i32
      %62 = tpu.iota {dimensions = array<i32: 0>} : vector<128x1xi32>
      %63 = vector.broadcast %61 : i32 to vector<128x1xi32>
      %64 = arith.addi %63, %62 : vector<128x1xi32>
      %65 = vector.broadcast %4 : i32 to vector<128x1xi32>
      %66 = arith.cmpi slt, %64, %65 : vector<128x1xi32>
      %cst_33 = arith.constant 0.000000e+00 : f32
      %67 = vector.broadcast %cst_33 : f32 to vector<128x1xf32>
      %68 = arith.cmpf ogt, %60, %67 : vector<128x1xf32>
      %cst_34 = arith.constant dense<true> : vector<128x1xi1>
      %69 = arith.xori %68, %cst_34 : vector<128x1xi1>
      %70 = arith.andi %69, %66 : vector<128x1xi1>
      %71 = arith.extui %70 : vector<128x1xi1> to vector<128x1xi32>
      %72 = arith.sitofp %71 : vector<128x1xi32> to vector<128x1xf32>
      %73 = arith.mulf %46, %46 : vector<128x1xf32>
      %74 = arith.mulf %47, %47 : vector<128x1xf32>
      %75 = arith.addf %73, %74 : vector<128x1xf32>
      %76 = arith.mulf %48, %48 : vector<128x1xf32>
      %77 = arith.addf %75, %76 : vector<128x1xf32>
      %cst_35 = arith.constant 0.000000e+00 : f32
      %cst_36 = arith.constant 1.000000e+30 : f32
      %78 = vector.broadcast %cst_35 : f32 to vector<128x1xf32>
      %79 = vector.broadcast %cst_36 : f32 to vector<128x1xf32>
      %80 = arith.select %70, %78, %79 : vector<128x1xi1>, vector<128x1xf32>
      %81 = arith.addf %77, %80 : vector<128x1xf32>
      %82 = tpu.iota {dimensions = array<i32: 1>} : vector<128x8xi32>
      %c3_i32 = arith.constant 3 : i32
      %83 = vector.broadcast %c3_i32 : i32 to vector<128x8xi32>
      %84 = arith.cmpi eq, %82, %83 : vector<128x8xi32>
      %85 = vector.shape_cast %81 : vector<128x1xf32> to vector<128x1xf32>
      %86 = vector.broadcast %85 : vector<128x1xf32> to vector<128x8xf32>
      %87 = arith.select %84, %86, %45 : vector<128x8xi1>, vector<128x8xf32>
      %c4_i32 = arith.constant 4 : i32
      %88 = vector.broadcast %c4_i32 : i32 to vector<128x8xi32>
      %89 = arith.cmpi eq, %82, %88 : vector<128x8xi32>
      %cst_37 = arith.constant 1.000000e+00 : f32
      %90 = vector.broadcast %cst_37 : f32 to vector<128x8xf32>
      %91 = arith.select %89, %90, %87 : vector<128x8xi1>, vector<128x8xf32>
      %c0_38 = arith.constant 0 : index
      %c0_39 = arith.constant 0 : index
      %92 = vector.load %arg8[%c0_38, %c0_39] : memref<128x8xf32, #tpu.memory_space<vmem>>, vector<128x8xf32>
      tpu.vector_store %arg8[%c0_38, %c0_39], %91 {strides = array<i32>} : memref<128x8xf32, #tpu.memory_space<vmem>>, vector<128x8xf32>,
      %c0_40 = arith.constant 0 : index
      %c0_41 = arith.constant 0 : index
      %93 = vector.load %arg9[%c0_40, %c0_41] : memref<128x1xf32, #tpu.memory_space<vmem>>, vector<128x1xf32>
      tpu.vector_store %arg9[%c0_40, %c0_41], %72 {strides = array<i32>} : memref<128x1xf32, #tpu.memory_space<vmem>>, vector<128x1xf32>,
      %cst_42 = arith.constant 1.000000e+30 : f32
      %94 = vector.broadcast %cst_42 : f32 to vector<128x1xf32>
      %c0_43 = arith.constant 0 : index
      %c0_44 = arith.constant 0 : index
      %95 = vector.load %arg11[%c0_43, %c0_44] : memref<128x1xf32, #tpu.memory_space<vmem>>, vector<128x1xf32>
      tpu.vector_store %arg11[%c0_43, %c0_44], %94 {strides = array<i32>} : memref<128x1xf32, #tpu.memory_space<vmem>>, vector<128x1xf32>,
      %c0_45 = arith.constant 0 : index
      %c0_46 = arith.constant 0 : index
      %96 = vector.load %arg16[%c0_45, %c0_46] : memref<1x1xf32, #tpu.memory_space<vmem>>, vector<1x1xf32>
      %97 = vector.shape_cast %72 : vector<128x1xf32> to vector<1x128x1xf32>
      %cst_47 = arith.constant dense<0.000000e+00> : vector<1xf32>
      %98 = vector.multi_reduction <add>, %97, %cst_47 [1, 2] : vector<1x128x1xf32> to vector<1xf32>
      %99 = vector.shape_cast %98 : vector<1xf32> to vector<1x1x1xf32>
      %100 = vector.extract %99[0, 0, 0] : f32 from vector<1x1x1xf32>
      %101 = vector.broadcast %100 : f32 to vector<1x1xf32>
      %102 = arith.addf %96, %101 : vector<1x1xf32>
      %c0_48 = arith.constant 0 : index
      %c0_49 = arith.constant 0 : index
      %103 = vector.load %arg16[%c0_48, %c0_49] : memref<1x1xf32, #tpu.memory_space<vmem>>, vector<1x1xf32>
      tpu.vector_store %arg16[%c0_48, %c0_49], %102 {strides = array<i32>} : memref<1x1xf32, #tpu.memory_space<vmem>>, vector<1x1xf32>,
      %c0_50 = arith.constant 0 : index
      %c0_51 = arith.constant 0 : index
      %104 = vector.load %arg17[%c0_50, %c0_51] : memref<1x1xf32, #tpu.memory_space<vmem>>, vector<1x1xf32>
      %105 = arith.mulf %72, %77 : vector<128x1xf32>
      %106 = vector.shape_cast %105 : vector<128x1xf32> to vector<1x128x1xf32>
      %cst_52 = arith.constant dense<0.000000e+00> : vector<1xf32>
      %107 = vector.multi_reduction <add>, %106, %cst_52 [1, 2] : vector<1x128x1xf32> to vector<1xf32>
      %108 = vector.shape_cast %107 : vector<1xf32> to vector<1x1x1xf32>
      %109 = vector.extract %108[0, 0, 0] : f32 from vector<1x1x1xf32>
      %110 = vector.broadcast %109 : f32 to vector<1x1xf32>
      %111 = arith.addf %104, %110 : vector<1x1xf32>
      %c0_53 = arith.constant 0 : index
      %c0_54 = arith.constant 0 : index
      %112 = vector.load %arg17[%c0_53, %c0_54] : memref<1x1xf32, #tpu.memory_space<vmem>>, vector<1x1xf32>
      tpu.vector_store %arg17[%c0_53, %c0_54], %111 {strides = array<i32>} : memref<1x1xf32, #tpu.memory_space<vmem>>, vector<1x1xf32>,
      %c0_55 = arith.constant 0 : index
      %c0_56 = arith.constant 0 : index
      %113 = vector.load %arg18[%c0_55, %c0_56] : memref<1x1xf32, #tpu.memory_space<vmem>>, vector<1x1xf32>
      %cst_57 = arith.constant 1.000000e+30 : f32
      %114 = vector.broadcast %cst_57 : f32 to vector<128x1xf32>
      %115 = arith.select %70, %77, %114 : vector<128x1xi1>, vector<128x1xf32>
      %116 = vector.shape_cast %115 : vector<128x1xf32> to vector<1x128x1xf32>
      %cst_58 = arith.constant dense<0x7F800000> : vector<1xf32>
      %117 = vector.multi_reduction <minimumf>, %116, %cst_58 [1, 2] : vector<1x128x1xf32> to vector<1xf32>
      %118 = vector.shape_cast %117 : vector<1xf32> to vector<1x1x1xf32>
      %119 = vector.extract %118[0, 0, 0] : f32 from vector<1x1x1xf32>
      %120 = vector.broadcast %119 : f32 to vector<1x1xf32>
      %121 = arith.minimumf %113, %120 : vector<1x1xf32>
      %c0_59 = arith.constant 0 : index
      %c0_60 = arith.constant 0 : index
      %122 = vector.load %arg18[%c0_59, %c0_60] : memref<1x1xf32, #tpu.memory_space<vmem>>, vector<1x1xf32>
      tpu.vector_store %arg18[%c0_59, %c0_60], %121 {strides = array<i32>} : memref<1x1xf32, #tpu.memory_space<vmem>>, vector<1x1xf32>,
    } else {
    }
    %c0_i32_10 = arith.constant 0 : i32
    %15 = arith.cmpi eq, %arg0, %c0_i32_10 : i32
    %16 = arith.extui %15 : i1 to i32
    %c0_i32_11 = arith.constant 0 : i32
    %17 = arith.cmpi ne, %16, %c0_i32_11 : i32
    scf.if %17 {
      %c0_29 = arith.constant 0 : index
      %c0_30 = arith.constant 0 : index
      %45 = vector.load %arg6[%c0_29, %c0_30] : memref<8x128xf32, #tpu.memory_space<vmem>>, vector<8x128xf32>
      %46 = vector.extract_strided_slice %45 {offsets = [0, 0], sizes = [1, 128], strides = [1, 1]} : vector<8x128xf32> to vector<1x128xf32>
      %47 = vector.broadcast %0 : f32 to vector<1x128xf32>
      %48 = arith.mulf %47, %46 : vector<1x128xf32>
      %49 = vector.extract_strided_slice %45 {offsets = [1, 0], sizes = [1, 128], strides = [1, 1]} : vector<8x128xf32> to vector<1x128xf32>
      %50 = vector.broadcast %1 : f32 to vector<1x128xf32>
      %51 = arith.mulf %50, %49 : vector<1x128xf32>
      %52 = arith.addf %48, %51 : vector<1x128xf32>
      %53 = vector.extract_strided_slice %45 {offsets = [2, 0], sizes = [1, 128], strides = [1, 1]} : vector<8x128xf32> to vector<1x128xf32>
      %54 = vector.broadcast %2 : f32 to vector<1x128xf32>
      %55 = arith.mulf %54, %53 : vector<1x128xf32>
      %56 = arith.addf %52, %55 : vector<1x128xf32>
      %57 = vector.broadcast %3 : f32 to vector<1x128xf32>
      %58 = arith.addf %56, %57 : vector<1x128xf32>
      %cst_31 = arith.constant -2.000000e+00 : f32
      %59 = vector.broadcast %cst_31 : f32 to vector<1x128xf32>
      %60 = arith.mulf %59, %58 : vector<1x128xf32>
      %c0_32 = arith.constant 0 : index
      %c0_33 = arith.constant 0 : index
      %61 = vector.load %arg4[%c0_32, %c0_33] : memref<8x1xf32, #tpu.memory_space<vmem>>, vector<8x1xf32>
      %62 = arith.mulf %61, %61 : vector<8x1xf32>
      %63 = vector.shape_cast %62 : vector<8x1xf32> to vector<1x8x1xf32>
      %cst_34 = arith.constant dense<0.000000e+00> : vector<1xf32>
      %64 = vector.multi_reduction <add>, %63, %cst_34 [1, 2] : vector<1x8x1xf32> to vector<1xf32>
      %65 = vector.shape_cast %64 : vector<1xf32> to vector<1x1x1xf32>
      %66 = vector.extract %65[0, 0, 0] : f32 from vector<1x1x1xf32>
      %67 = vector.broadcast %66 : f32 to vector<1x1xf32>
      %68 = tpu.reciprocal %67 : vector<1x1xf32> -> vector<1x1xf32>
      %69 = vector.broadcast %68 : vector<1x1xf32> to vector<1x128xf32>
      %70 = arith.mulf %60, %69 : vector<1x128xf32>
      %71 = vector.broadcast %70 : vector<1x128xf32> to vector<8x128xf32>
      %72 = vector.broadcast %61 : vector<8x1xf32> to vector<8x128xf32>
      %73 = arith.mulf %71, %72 : vector<8x128xf32>
      %74 = arith.addf %45, %73 : vector<8x128xf32>
      %75 = vector.extract_strided_slice %74 {offsets = [0, 0], sizes = [1, 128], strides = [1, 1]} : vector<8x128xf32> to vector<1x128xf32>
      %76 = vector.extract_strided_slice %74 {offsets = [1, 0], sizes = [1, 128], strides = [1, 1]} : vector<8x128xf32> to vector<1x128xf32>
      %77 = vector.extract_strided_slice %74 {offsets = [2, 0], sizes = [1, 128], strides = [1, 1]} : vector<8x128xf32> to vector<1x128xf32>
      %78 = arith.mulf %75, %75 : vector<1x128xf32>
      %79 = arith.mulf %76, %76 : vector<1x128xf32>
      %80 = arith.addf %78, %79 : vector<1x128xf32>
      %81 = arith.mulf %77, %77 : vector<1x128xf32>
      %82 = arith.addf %80, %81 : vector<1x128xf32>
      %83 = tpu.iota {dimensions = array<i32: 1>} : vector<1x128xi32>
      %84 = vector.broadcast %6 : i32 to vector<1x128xi32>
      %85 = arith.addi %84, %83 : vector<1x128xi32>
      %86 = vector.broadcast %4 : i32 to vector<1x128xi32>
      %87 = arith.cmpi slt, %85, %86 : vector<1x128xi32>
      %cst_35 = arith.constant 0.000000e+00 : f32
      %88 = vector.broadcast %cst_35 : f32 to vector<1x128xf32>
      %89 = arith.cmpf ogt, %60, %88 : vector<1x128xf32>
      %90 = arith.andi %89, %87 : vector<1x128xi1>
      %cst_36 = arith.constant 0.000000e+00 : f32
      %cst_37 = arith.constant 1.000000e+30 : f32
      %91 = vector.broadcast %cst_36 : f32 to vector<1x128xf32>
      %92 = vector.broadcast %cst_37 : f32 to vector<1x128xf32>
      %93 = arith.select %90, %91, %92 : vector<1x128xi1>, vector<1x128xf32>
      %94 = arith.addf %82, %93 : vector<1x128xf32>
      %95 = tpu.iota {dimensions = array<i32: 0>} : vector<8x128xi32>
      %c3_i32 = arith.constant 3 : i32
      %96 = vector.broadcast %c3_i32 : i32 to vector<8x128xi32>
      %97 = arith.cmpi slt, %95, %96 : vector<8x128xi32>
      %cst_38 = arith.constant -2.000000e+00 : f32
      %98 = vector.broadcast %cst_38 : f32 to vector<8x128xf32>
      %99 = arith.mulf %98, %74 : vector<8x128xf32>
      %cst_39 = arith.constant 0.000000e+00 : f32
      %100 = vector.broadcast %cst_39 : f32 to vector<8x128xf32>
      %101 = arith.select %97, %99, %100 : vector<8x128xi1>, vector<8x128xf32>
      %c3_i32_40 = arith.constant 3 : i32
      %102 = vector.broadcast %c3_i32_40 : i32 to vector<8x128xi32>
      %103 = arith.cmpi eq, %95, %102 : vector<8x128xi32>
      %cst_41 = arith.constant 1.000000e+00 : f32
      %104 = vector.broadcast %cst_41 : f32 to vector<8x128xf32>
      %105 = arith.select %103, %104, %101 : vector<8x128xi1>, vector<8x128xf32>
      %c4_i32 = arith.constant 4 : i32
      %106 = vector.broadcast %c4_i32 : i32 to vector<8x128xi32>
      %107 = arith.cmpi eq, %95, %106 : vector<8x128xi32>
      %108 = vector.shape_cast %94 : vector<1x128xf32> to vector<1x128xf32>
      %109 = vector.broadcast %108 : vector<1x128xf32> to vector<8x128xf32>
      %110 = arith.select %107, %109, %105 : vector<8x128xi1>, vector<8x128xf32>
      %c0_42 = arith.constant 0 : index
      %111 = arith.index_cast %6 : i32 to index
      %112 = vector.load %arg10[%c0_42, %111] : memref<8x384xf32, #tpu.memory_space<vmem>>, vector<8x128xf32>
      tpu.vector_store %arg10[%c0_42, %111], %110 {strides = array<i32>} : memref<8x384xf32, #tpu.memory_space<vmem>>, vector<8x128xf32>,
      %cst_43 = arith.constant 1.000000e+30 : f32
      %113 = vector.broadcast %cst_43 : f32 to vector<1x128xf32>
      %c0_44 = arith.constant 0 : index
      %114 = arith.index_cast %6 : i32 to index
      %115 = vector.load %arg12[%c0_44, %114] : memref<1x384xf32, #tpu.memory_space<vmem>>, vector<1x128xf32>
      tpu.vector_store %arg12[%c0_44, %114], %113 {strides = array<i32>} : memref<1x384xf32, #tpu.memory_space<vmem>>, vector<1x128xf32>,
      %116 = arith.extui %90 : vector<1x128xi1> to vector<1x128xi32>
      %117 = arith.sitofp %116 : vector<1x128xi32> to vector<1x128xf32>
      %c0_45 = arith.constant 0 : index
      %c0_46 = arith.constant 0 : index
      %118 = vector.load %arg15[%c0_45, %c0_46] : memref<1x1xf32, #tpu.memory_space<vmem>>, vector<1x1xf32>
      %119 = vector.shape_cast %117 : vector<1x128xf32> to vector<1x1x128xf32>
      %cst_47 = arith.constant dense<0.000000e+00> : vector<1xf32>
      %120 = vector.multi_reduction <add>, %119, %cst_47 [1, 2] : vector<1x1x128xf32> to vector<1xf32>
      %121 = vector.shape_cast %120 : vector<1xf32> to vector<1x1x1xf32>
      %122 = vector.extract %121[0, 0, 0] : f32 from vector<1x1x1xf32>
      %123 = vector.broadcast %122 : f32 to vector<1x1xf32>
      %124 = arith.addf %118, %123 : vector<1x1xf32>
      %c0_48 = arith.constant 0 : index
      %c0_49 = arith.constant 0 : index
      %125 = vector.load %arg15[%c0_48, %c0_49] : memref<1x1xf32, #tpu.memory_space<vmem>>, vector<1x1xf32>
      tpu.vector_store %arg15[%c0_48, %c0_49], %124 {strides = array<i32>} : memref<1x1xf32, #tpu.memory_space<vmem>>, vector<1x1xf32>,
      %c0_50 = arith.constant 0 : index
      %c0_51 = arith.constant 0 : index
      %126 = vector.load %arg19[%c0_50, %c0_51] : memref<1x1xf32, #tpu.memory_space<vmem>>, vector<1x1xf32>
      %127 = arith.mulf %117, %82 : vector<1x128xf32>
      %128 = vector.shape_cast %127 : vector<1x128xf32> to vector<1x1x128xf32>
      %cst_52 = arith.constant dense<0.000000e+00> : vector<1xf32>
      %129 = vector.multi_reduction <add>, %128, %cst_52 [1, 2] : vector<1x1x128xf32> to vector<1xf32>
      %130 = vector.shape_cast %129 : vector<1xf32> to vector<1x1x1xf32>
      %131 = vector.extract %130[0, 0, 0] : f32 from vector<1x1x1xf32>
      %132 = vector.broadcast %131 : f32 to vector<1x1xf32>
      %133 = arith.addf %126, %132 : vector<1x1xf32>
      %c0_53 = arith.constant 0 : index
      %c0_54 = arith.constant 0 : index
      %134 = vector.load %arg19[%c0_53, %c0_54] : memref<1x1xf32, #tpu.memory_space<vmem>>, vector<1x1xf32>
      tpu.vector_store %arg19[%c0_53, %c0_54], %133 {strides = array<i32>} : memref<1x1xf32, #tpu.memory_space<vmem>>, vector<1x1xf32>,
      %c0_55 = arith.constant 0 : index
      %c0_56 = arith.constant 0 : index
      %135 = vector.load %arg20[%c0_55, %c0_56] : memref<1x1xf32, #tpu.memory_space<vmem>>, vector<1x1xf32>
      %cst_57 = arith.constant 1.000000e+30 : f32
      %136 = vector.broadcast %cst_57 : f32 to vector<1x128xf32>
      %137 = arith.select %90, %82, %136 : vector<1x128xi1>, vector<1x128xf32>
      %138 = vector.shape_cast %137 : vector<1x128xf32> to vector<1x1x128xf32>
      %cst_58 = arith.constant dense<0x7F800000> : vector<1xf32>
      %139 = vector.multi_reduction <minimumf>, %138, %cst_58 [1, 2] : vector<1x1x128xf32> to vector<1xf32>
      %140 = vector.shape_cast %139 : vector<1xf32> to vector<1x1x1xf32>
      %141 = vector.extract %140[0, 0, 0] : f32 from vector<1x1x1xf32>
      %142 = vector.broadcast %141 : f32 to vector<1x1xf32>
      %143 = arith.minimumf %135, %142 : vector<1x1xf32>
      %c0_59 = arith.constant 0 : index
      %c0_60 = arith.constant 0 : index
      %144 = vector.load %arg20[%c0_59, %c0_60] : memref<1x1xf32, #tpu.memory_space<vmem>>, vector<1x1xf32>
      tpu.vector_store %arg20[%c0_59, %c0_60], %143 {strides = array<i32>} : memref<1x1xf32, #tpu.memory_space<vmem>>, vector<1x1xf32>,
    } else {
    }
    %c0_12 = arith.constant 0 : index
    %c0_13 = arith.constant 0 : index
    %18 = vector.load %arg8[%c0_12, %c0_13] : memref<128x8xf32, #tpu.memory_space<vmem>>, vector<128x8xf32>
    %c0_14 = arith.constant 0 : index
    %19 = arith.index_cast %6 : i32 to index
    %20 = vector.load %arg10[%c0_14, %19] : memref<8x384xf32, #tpu.memory_space<vmem>>, vector<8x128xf32>
    %cst = arith.constant dense<0.000000e+00> : vector<128x128xf32>
    %21 = tpu.matmul %18, %20, %cst {dimension_numbers = #tpu.dot_dimension_numbers<[1], [0], [0], [1], [0, 0, 1, 1], [], []>} : vector<128x8xf32>, vector<8x128xf32>, vector<128x128xf32> -> vector<128x128xf32>
    %c0_15 = arith.constant 0 : index
    %c0_16 = arith.constant 0 : index
    %22 = vector.load %arg11[%c0_15, %c0_16] : memref<128x1xf32, #tpu.memory_space<vmem>>, vector<128x1xf32>
    %cst_17 = arith.constant dense<0x7F800000> : vector<128xf32>
    %23 = vector.multi_reduction <minimumf>, %21, %cst_17 [1] : vector<128x128xf32> to vector<128xf32>
    %24 = vector.shape_cast %23 : vector<128xf32> to vector<128x1xf32>
    %25 = arith.minimumf %22, %24 : vector<128x1xf32>
    %c0_18 = arith.constant 0 : index
    %c0_19 = arith.constant 0 : index
    %26 = vector.load %arg11[%c0_18, %c0_19] : memref<128x1xf32, #tpu.memory_space<vmem>>, vector<128x1xf32>
    tpu.vector_store %arg11[%c0_18, %c0_19], %25 {strides = array<i32>} : memref<128x1xf32, #tpu.memory_space<vmem>>, vector<128x1xf32>,
    %c0_20 = arith.constant 0 : index
    %27 = arith.index_cast %6 : i32 to index
    %28 = vector.load %arg12[%c0_20, %27] : memref<1x384xf32, #tpu.memory_space<vmem>>, vector<1x128xf32>
    %cst_21 = arith.constant dense<0x7F800000> : vector<128xf32>
    %29 = vector.multi_reduction <minimumf>, %21, %cst_21 [0] : vector<128x128xf32> to vector<128xf32>
    %30 = vector.shape_cast %29 : vector<128xf32> to vector<1x128xf32>
    %31 = arith.minimumf %28, %30 : vector<1x128xf32>
    %c0_22 = arith.constant 0 : index
    %32 = arith.index_cast %6 : i32 to index
    %33 = vector.load %arg12[%c0_22, %32] : memref<1x384xf32, #tpu.memory_space<vmem>>, vector<1x128xf32>
    tpu.vector_store %arg12[%c0_22, %32], %31 {strides = array<i32>} : memref<1x384xf32, #tpu.memory_space<vmem>>, vector<1x128xf32>,
    %c2_i32 = arith.constant 2 : i32
    %34 = arith.cmpi eq, %arg1, %c2_i32 : i32
    %35 = arith.extui %34 : i1 to i32
    %c0_i32_23 = arith.constant 0 : i32
    %36 = arith.cmpi ne, %35, %c0_i32_23 : i32
    scf.if %36 {
      %c0_29 = arith.constant 0 : index
      %c0_30 = arith.constant 0 : index
      %45 = vector.load %arg13[%c0_29, %c0_30] : memref<1x1xf32, #tpu.memory_space<vmem>>, vector<1x1xf32>
      %c0_31 = arith.constant 0 : index
      %c0_32 = arith.constant 0 : index
      %46 = vector.load %arg9[%c0_31, %c0_32] : memref<128x1xf32, #tpu.memory_space<vmem>>, vector<128x1xf32>
      %c0_33 = arith.constant 0 : index
      %c0_34 = arith.constant 0 : index
      %47 = vector.load %arg11[%c0_33, %c0_34] : memref<128x1xf32, #tpu.memory_space<vmem>>, vector<128x1xf32>
      %48 = arith.mulf %46, %47 : vector<128x1xf32>
      %49 = vector.shape_cast %48 : vector<128x1xf32> to vector<1x128x1xf32>
      %cst_35 = arith.constant dense<0.000000e+00> : vector<1xf32>
      %50 = vector.multi_reduction <add>, %49, %cst_35 [1, 2] : vector<1x128x1xf32> to vector<1xf32>
      %51 = vector.shape_cast %50 : vector<1xf32> to vector<1x1x1xf32>
      %52 = vector.extract %51[0, 0, 0] : f32 from vector<1x1x1xf32>
      %53 = vector.broadcast %52 : f32 to vector<1x1xf32>
      %54 = arith.addf %45, %53 : vector<1x1xf32>
      %c0_36 = arith.constant 0 : index
      %c0_37 = arith.constant 0 : index
      %55 = vector.load %arg13[%c0_36, %c0_37] : memref<1x1xf32, #tpu.memory_space<vmem>>, vector<1x1xf32>
      tpu.vector_store %arg13[%c0_36, %c0_37], %54 {strides = array<i32>} : memref<1x1xf32, #tpu.memory_space<vmem>>, vector<1x1xf32>,
    } else {
    }
    %c2_i32_24 = arith.constant 2 : i32
    %37 = arith.cmpi eq, %arg0, %c2_i32_24 : i32
    %38 = arith.extui %37 : i1 to i32
    %c0_i32_25 = arith.constant 0 : i32
    %39 = arith.cmpi ne, %38, %c0_i32_25 : i32
    scf.if %39 {
      %c0_29 = arith.constant 0 : index
      %c0_30 = arith.constant 0 : index
      %45 = vector.load %arg6[%c0_29, %c0_30] : memref<8x128xf32, #tpu.memory_space<vmem>>, vector<8x128xf32>
      %46 = vector.extract_strided_slice %45 {offsets = [0, 0], sizes = [1, 128], strides = [1, 1]} : vector<8x128xf32> to vector<1x128xf32>
      %47 = vector.broadcast %0 : f32 to vector<1x128xf32>
      %48 = arith.mulf %47, %46 : vector<1x128xf32>
      %49 = vector.extract_strided_slice %45 {offsets = [1, 0], sizes = [1, 128], strides = [1, 1]} : vector<8x128xf32> to vector<1x128xf32>
      %50 = vector.broadcast %1 : f32 to vector<1x128xf32>
      %51 = arith.mulf %50, %49 : vector<1x128xf32>
      %52 = arith.addf %48, %51 : vector<1x128xf32>
      %53 = vector.extract_strided_slice %45 {offsets = [2, 0], sizes = [1, 128], strides = [1, 1]} : vector<8x128xf32> to vector<1x128xf32>
      %54 = vector.broadcast %2 : f32 to vector<1x128xf32>
      %55 = arith.mulf %54, %53 : vector<1x128xf32>
      %56 = arith.addf %52, %55 : vector<1x128xf32>
      %57 = vector.broadcast %3 : f32 to vector<1x128xf32>
      %58 = arith.addf %56, %57 : vector<1x128xf32>
      %cst_31 = arith.constant -2.000000e+00 : f32
      %59 = vector.broadcast %cst_31 : f32 to vector<1x128xf32>
      %60 = arith.mulf %59, %58 : vector<1x128xf32>
      %61 = tpu.iota {dimensions = array<i32: 1>} : vector<1x128xi32>
      %62 = vector.broadcast %6 : i32 to vector<1x128xi32>
      %63 = arith.addi %62, %61 : vector<1x128xi32>
      %cst_32 = arith.constant 0.000000e+00 : f32
      %64 = vector.broadcast %cst_32 : f32 to vector<1x128xf32>
      %65 = arith.cmpf ogt, %60, %64 : vector<1x128xf32>
      %66 = vector.broadcast %4 : i32 to vector<1x128xi32>
      %67 = arith.cmpi slt, %63, %66 : vector<1x128xi32>
      %68 = arith.andi %65, %67 : vector<1x128xi1>
      %c0_33 = arith.constant 0 : index
      %c0_34 = arith.constant 0 : index
      %69 = vector.load %arg14[%c0_33, %c0_34] : memref<1x1xf32, #tpu.memory_space<vmem>>, vector<1x1xf32>
      %cst_35 = arith.constant 0.000000e+00 : f32
      %70 = vector.broadcast %cst_35 : f32 to vector<1x128xf32>
      %71 = arith.select %68, %31, %70 : vector<1x128xi1>, vector<1x128xf32>
      %72 = vector.shape_cast %71 : vector<1x128xf32> to vector<1x1x128xf32>
      %cst_36 = arith.constant dense<0.000000e+00> : vector<1xf32>
      %73 = vector.multi_reduction <add>, %72, %cst_36 [1, 2] : vector<1x1x128xf32> to vector<1xf32>
      %74 = vector.shape_cast %73 : vector<1xf32> to vector<1x1x1xf32>
      %75 = vector.extract %74[0, 0, 0] : f32 from vector<1x1x1xf32>
      %76 = vector.broadcast %75 : f32 to vector<1x1xf32>
      %77 = arith.addf %69, %76 : vector<1x1xf32>
      %c0_37 = arith.constant 0 : index
      %c0_38 = arith.constant 0 : index
      %78 = vector.load %arg14[%c0_37, %c0_38] : memref<1x1xf32, #tpu.memory_space<vmem>>, vector<1x1xf32>
      tpu.vector_store %arg14[%c0_37, %c0_38], %77 {strides = array<i32>} : memref<1x1xf32, #tpu.memory_space<vmem>>, vector<1x1xf32>,
    } else {
    }
    %c2_i32_26 = arith.constant 2 : i32
    %40 = arith.cmpi eq, %arg0, %c2_i32_26 : i32
    %c2_i32_27 = arith.constant 2 : i32
    %41 = arith.cmpi eq, %arg1, %c2_i32_27 : i32
    %42 = arith.andi %40, %41 : i1
    %43 = arith.extui %42 : i1 to i32
    %c0_i32_28 = arith.constant 0 : i32
    %44 = arith.cmpi ne, %43, %c0_i32_28 : i32
    scf.if %44 {
      %c0_29 = arith.constant 0 : index
      %c0_30 = arith.constant 0 : index
      %45 = vector.load %arg15[%c0_29, %c0_30] : memref<1x1xf32, #tpu.memory_space<vmem>>, vector<1x1xf32>
      %c0_31 = arith.constant 0 : index
      %c0_32 = arith.constant 0 : index
      %46 = vector.load %arg16[%c0_31, %c0_32] : memref<1x1xf32, #tpu.memory_space<vmem>>, vector<1x1xf32>
      %cst_33 = arith.constant 0.000000e+00 : f32
      %47 = vector.broadcast %cst_33 : f32 to vector<1x1xf32>
      %48 = arith.cmpf ogt, %45, %47 : vector<1x1xf32>
      %cst_34 = arith.constant 0.000000e+00 : f32
      %49 = vector.broadcast %cst_34 : f32 to vector<1x1xf32>
      %50 = arith.cmpf ogt, %46, %49 : vector<1x1xf32>
      %c0_35 = arith.constant 0 : index
      %c0_36 = arith.constant 0 : index
      %51 = vector.load %arg13[%c0_35, %c0_36] : memref<1x1xf32, #tpu.memory_space<vmem>>, vector<1x1xf32>
      %c0_37 = arith.constant 0 : index
      %c0_38 = arith.constant 0 : index
      %52 = vector.load %arg17[%c0_37, %c0_38] : memref<1x1xf32, #tpu.memory_space<vmem>>, vector<1x1xf32>
      %53 = arith.select %48, %51, %52 : vector<1x1xi1>, vector<1x1xf32>
      %cst_39 = arith.constant 1.000000e+00 : f32
      %54 = vector.broadcast %cst_39 : f32 to vector<1x1xf32>
      %55 = arith.maximumf %46, %54 : vector<1x1xf32>
      %56 = arith.divf %53, %55 : vector<1x1xf32>
      %c0_40 = arith.constant 0 : index
      %c0_41 = arith.constant 0 : index
      %57 = vector.load %arg20[%c0_40, %c0_41] : memref<1x1xf32, #tpu.memory_space<vmem>>, vector<1x1xf32>
      %58 = arith.select %50, %56, %57 : vector<1x1xi1>, vector<1x1xf32>
      %c0_42 = arith.constant 0 : index
      %c0_43 = arith.constant 0 : index
      %59 = vector.load %arg14[%c0_42, %c0_43] : memref<1x1xf32, #tpu.memory_space<vmem>>, vector<1x1xf32>
      %c0_44 = arith.constant 0 : index
      %c0_45 = arith.constant 0 : index
      %60 = vector.load %arg19[%c0_44, %c0_45] : memref<1x1xf32, #tpu.memory_space<vmem>>, vector<1x1xf32>
      %61 = arith.select %50, %59, %60 : vector<1x1xi1>, vector<1x1xf32>
      %cst_46 = arith.constant 1.000000e+00 : f32
      %62 = vector.broadcast %cst_46 : f32 to vector<1x1xf32>
      %63 = arith.maximumf %45, %62 : vector<1x1xf32>
      %64 = arith.divf %61, %63 : vector<1x1xf32>
      %c0_47 = arith.constant 0 : index
      %c0_48 = arith.constant 0 : index
      %65 = vector.load %arg18[%c0_47, %c0_48] : memref<1x1xf32, #tpu.memory_space<vmem>>, vector<1x1xf32>
      %66 = arith.select %48, %64, %65 : vector<1x1xi1>, vector<1x1xf32>
      %cst_49 = arith.constant 5.000000e-01 : f32
      %67 = vector.broadcast %cst_49 : f32 to vector<1x1xf32>
      %68 = arith.mulf %67, %58 : vector<1x1xf32>
      %cst_50 = arith.constant 5.000000e-01 : f32
      %69 = vector.broadcast %cst_50 : f32 to vector<1x1xf32>
      %70 = arith.mulf %69, %66 : vector<1x1xf32>
      %71 = arith.addf %68, %70 : vector<1x1xf32>
      %cst_51 = arith.constant 1.000000e+02 : f32
      %72 = vector.broadcast %cst_51 : f32 to vector<1x1xf32>
      %73 = arith.mulf %71, %72 : vector<1x1xf32>
      %c0_52 = arith.constant 0 : index
      %c0_53 = arith.constant 0 : index
      %74 = vector.load %arg7[%c0_52, %c0_53] : memref<1x1xf32, #tpu.memory_space<vmem>>, vector<1x1xf32>
      tpu.vector_store %arg7[%c0_52, %c0_53], %73 {strides = array<i32>} : memref<1x1xf32, #tpu.memory_space<vmem>>, vector<1x1xf32>,
    } else {
    }
    return
  }
  func.func @transform_0(%arg0: i32, %arg1: i32) -> (i32, i32) {
    %c0_i32 = arith.constant 0 : i32
    %c0_i32_0 = arith.constant 0 : i32
    %c0_i32_1 = arith.constant 0 : i32
    return %c0_i32, %c0_i32_0 : i32, i32
  }
  func.func @transform_1(%arg0: i32, %arg1: i32) -> (i32, i32) {
    %c0_i32 = arith.constant 0 : i32
    %c0_i32_0 = arith.constant 0 : i32
    %c0_i32_1 = arith.constant 0 : i32
    return %c0_i32, %c0_i32_0 : i32, i32
  }
  func.func @transform_2(%arg0: i32, %arg1: i32) -> (i32, i32) {
    %c0_i32 = arith.constant 0 : i32
    %c0_i32_0 = arith.constant 0 : i32
    %c0_i32_1 = arith.constant 0 : i32
    return %c0_i32, %c0_i32_0 : i32, i32
  }
  func.func @transform_3(%arg0: i32, %arg1: i32) -> (i32, i32) {
    %c0_i32 = arith.constant 0 : i32
    %c0_i32_0 = arith.constant 0 : i32
    return %arg0, %c0_i32 : i32, i32
  }
  func.func @transform_4(%arg0: i32, %arg1: i32) -> (i32, i32) {
    %c0_i32 = arith.constant 0 : i32
    %c0_i32_0 = arith.constant 0 : i32
    return %c0_i32, %arg1 : i32, i32
  }
  func.func @transform_5(%arg0: i32, %arg1: i32) -> (i32, i32) {
    %c0_i32 = arith.constant 0 : i32
    %c0_i32_0 = arith.constant 0 : i32
    %c0_i32_1 = arith.constant 0 : i32
    return %c0_i32, %c0_i32_0 : i32, i32
  }
}

</mosaic_0001>

<llo_original>
// kernel: point_loss.1
$region0: #{point_loss.1}
  #allocation0 [shape = 'u32[]', space=smem, size = 0x4, offset = 0x4, fixed_abs, tag = 'smem constant byte address 0x4 - core index']
  #allocation1 [shape = 'u32[144,128]{1,0:T(1,128)}', space=vmem, size = 0x12000, scoped, tag = 'internal scratch']
  #allocation2 [shape = 'f32[128,8]{1,0:T(8,128)}', space=vmem, size = 0x10000, scoped, tag = 'scratch operand']
  #allocation3 [shape = 'f32[128,1]{1,0:T(8,128)}', space=vmem, size = 0x10000, scoped, tag = 'scratch operand']
  #allocation4 [shape = 'f32[8,384]{1,0:T(8,128)}', space=vmem, size = 0x3000, scoped, tag = 'scratch operand']
  #allocation5 [shape = 'f32[128,1]{1,0:T(8,128)}', space=vmem, size = 0x10000, scoped, tag = 'scratch operand']
  #allocation6 [shape = 'f32[1,384]{1,0:T(1,128)}', space=vmem, size = 0x600, scoped, tag = 'scratch operand']
  #allocation7 [shape = 'f32[1,1]{1,0:T(1,128)}', space=vmem, size = 0x200, scoped, tag = 'scratch operand']
  #allocation8 [shape = 'f32[1,1]{1,0:T(1,128)}', space=vmem, size = 0x200, scoped, tag = 'scratch operand']
  #allocation9 [shape = 'f32[1,1]{1,0:T(1,128)}', space=vmem, size = 0x200, scoped, tag = 'scratch operand']
  #allocation10 [shape = 'f32[1,1]{1,0:T(1,128)}', space=vmem, size = 0x200, scoped, tag = 'scratch operand']
  #allocation11 [shape = 'f32[1,1]{1,0:T(1,128)}', space=vmem, size = 0x200, scoped, tag = 'scratch operand']
  #allocation12 [shape = 'f32[1,1]{1,0:T(1,128)}', space=vmem, size = 0x200, scoped, tag = 'scratch operand']
  #allocation13 [shape = 'f32[1,1]{1,0:T(1,128)}', space=vmem, size = 0x200, scoped, tag = 'scratch operand']
  #allocation14 [shape = 'f32[1,1]{1,0:T(1,128)}', space=vmem, size = 0x200, scoped, tag = 'scratch operand']
  #allocation15 [shape = 's32[1,1]{1,0:T(1,128)S(6)}', space=smem, size = 0x200, scoped, tag = 'scoped memory for point_loss.1']
  %s0 = inlined_call_operand.vmem [shape: f32[1,4], index: 0, kind: input, shape index: {}]
  %s1 = inlined_call_operand.<no memory space> [shape: s32[1,1], index: 1, kind: input, shape index: {}]
  %s2 = inlined_call_operand.vmem [shape: f32[8,1], index: 2, kind: input, shape index: {}]
  %s3 = inlined_call_operand.vmem [shape: f32[384,8], index: 3, kind: input, shape index: {}]
  %s4 = inlined_call_operand.vmem [shape: f32[8,384], index: 4, kind: input, shape index: {}]
  %s5 = inlined_call_operand.hbm [shape: f32[1,1], index: 5, kind: output, shape index: {}]
  %s6 = sld [smem:[#allocation0]]
  $region81: #{point_loss.1} parent=0
    _
  %s8 = ssub.s32 1, %s6
  %s9 = scalar_select 0, %s8, %s6
  %10 = sst [smem:[#allocation15]] %s1
  $region1: #{point_loss.1} parent=0
    #allocation16 [shape = 'u8[512]{0}', space=smem, size = 0x200, scoped, tag = 'input window, operand 0, single buffered']
    #allocation17 [shape = 's32[2]{0}', space=sflag, size = 0x8, scoped, tag = 'scoped memory for point_loss.1']
    #allocation18 [shape = 's32[2]{0}', space=sflag, size = 0x8, scoped, tag = 'scoped memory for point_loss.1']
    #allocation19 [shape = 'u8[512]{0}', space=vmem, size = 0x400, scoped, tag = 'output window, operand 0, single buffered']
    %11 = vsyncpa [#allocation18], 0
    %12 = vsyncpa [#allocation17], 0
    loop: start=0, step=1, limit=11
    $region2: #{point_loss.1} parent=1 // loop_pre_header
      _
    $region3: #{point_loss.1} parent=1 // loop_header
      %s14 = sphi 0, %s18
      %p15 = scmp.ge.s32.totalorder %s14, 11
      %s21 = sphi 0, %s33
      %s22 = sphi 0, %s29
      %s23 = sphi 0, %s21
      %s24 = sphi 0, %s22
      %s25 = sphi 0, %s23
      %s26 = sphi 0, %s24
      %s34 = sphi 0, %s34
      %s36 = sphi 0, %s34
      %s37 = sphi 0, %s36
      %s51 = sphi 0, %s37
      %s55 = sphi 0, %s55
      %s57 = sphi 0, %s55
      %s58 = sphi 0, %s57
      %s72 = sphi 0, %s58
      %s76 = sphi 0, %s76
      %s78 = sphi 0, %s76
      %s79 = sphi 0, %s78
      %s93 = sphi 0, %s79
      %s99 = sphi 0, %s101
      %s102 = sphi 0, %s99
      %s103 = sphi 0, %s102
      %s119 = sphi 0, %s103
      %s125 = sphi 0, %s127
      %s128 = sphi 0, %s125
      %s129 = sphi 0, %s128
      %s145 = sphi 0, %s129
      %s149 = sphi 0, %s149
      %s151 = sphi 0, %s149
      %s152 = sphi 0, %s151
      %s166 = sphi 0, %s152
    $region4: #{point_loss.1} parent=1 // loop_header_branch
      %17 = sbr.rel (%p15) target = $region8
    $region5: #{point_loss.1} parent=1 // loop_body
      %s19 = ssub.s32 %s14, 1
      %s20 = ssub.s32 %s14, 2
      %s27 = sadd.s32 1, %s22
      %p28 = scmp.ge.s32.totalorder %s27, 3
      %s29 = scalar_select %p28, 0, %s27
      %s30 = sadd.s32 1, %s21
      %s31 = scalar_select %p28, %s30, %s21
      %p32 = scmp.ge.s32.totalorder %s31, 3
      %s33 = scalar_select %p32, 0, %s31
      %s35 = sadd.s32 %s34, 1
      %p38 = scmp.eq.s32.totalorder %s14, 8
      %p39 = scmp.ne.s32.totalorder %s34, %s36
      %p40 = scmp.eq.s32.totalorder %s14, 0
      %p41 = por %p39, %p40
      %p42 = scmp.ne.s32.totalorder %s34, %s36
      %p43 = scmp.eq.s32.totalorder %s19, 8
      %p44 = por %p42, %p43
      %p45 = scmp.ne.s32.totalorder %s36, %s37
      %p46 = scmp.eq.s32.totalorder %s19, 0
      %p47 = por %p45, %p46
      %p48 = scmp.ne.s32.totalorder %s36, %s37
      %p49 = scmp.eq.s32.totalorder %s20, 8
      %p50 = por %p48, %p49
      %p52 = scmp.ne.s32.totalorder %s37, %s51
      %p53 = scmp.eq.s32.totalorder %s20, 0
      %p54 = por %p52, %p53
      %s56 = sadd.s32 %s55, 1
      %p59 = scmp.eq.s32.totalorder %s14, 8
      %p60 = scmp.ne.s32.totalorder %s55, %s57
      %p61 = scmp.eq.s32.totalorder %s14, 0
      %p62 = por %p60, %p61
      %p63 = scmp.ne.s32.totalorder %s55, %s57
      %p64 = scmp.eq.s32.totalorder %s19, 8
      %p65 = por %p63, %p64
      %p66 = scmp.ne.s32.totalorder %s57, %s58
      %p67 = scmp.eq.s32.totalorder %s19, 0
      %p68 = por %p66, %p67
      %p69 = scmp.ne.s32.totalorder %s57, %s58
      %p70 = scmp.eq.s32.totalorder %s20, 8
      %p71 = por %p69, %p70
      %p73 = scmp.ne.s32.totalorder %s58, %s72
      %p74 = scmp.eq.s32.totalorder %s20, 0
      %p75 = por %p73, %p74
      %s77 = sadd.s32 %s76, 1
      %p80 = scmp.eq.s32.totalorder %s14, 8
      %p81 = scmp.ne.s32.totalorder %s76, %s78
      %p82 = scmp.eq.s32.totalorder %s14, 0
      %p83 = por %p81, %p82
      %p84 = scmp.ne.s32.totalorder %s76, %s78
      %p85 = scmp.eq.s32.totalorder %s19, 8
      %p86 = por %p84, %p85
      %p87 = scmp.ne.s32.totalorder %s78, %s79
      %p88 = scmp.eq.s32.totalorder %s19, 0
      %p89 = por %p87, %p88
      %p90 = scmp.ne.s32.totalorder %s78, %s79
      %p91 = scmp.eq.s32.totalorder %s20, 8
      %p92 = por %p90, %p91
      %p94 = scmp.ne.s32.totalorder %s79, %s93
      %p95 = scmp.eq.s32.totalorder %s20, 0
      %p96 = por %p94, %p95
      %s97 = ssub.s32 %s21, %s33
      %p98 = scmp.eq.s32.totalorder %s97, 0
      %s100 = sadd.s32 %s99, 1
      %s101 = scalar_select %p98, %s99, %s100
      %p104 = pneg %p98
      %p105 = scmp.eq.s32.totalorder %s14, 8
      %p106 = por %p104, %p105
      %p107 = scmp.ne.s32.totalorder %s99, %s102
      %p108 = scmp.eq.s32.totalorder %s14, 0
      %p109 = por %p107, %p108
      %p110 = scmp.ne.s32.totalorder %s99, %s102
      %p111 = scmp.eq.s32.totalorder %s19, 8
      %p112 = por %p110, %p111
      %p113 = scmp.ne.s32.totalorder %s102, %s103
      %p114 = scmp.eq.s32.totalorder %s19, 0
      %p115 = por %p113, %p114
      %p116 = scmp.ne.s32.totalorder %s102, %s103
      %p117 = scmp.eq.s32.totalorder %s20, 8
      %p118 = por %p116, %p117
      %p120 = scmp.ne.s32.totalorder %s103, %s119
      %p121 = scmp.eq.s32.totalorder %s20, 0
      %p122 = por %p120, %p121
      %s123 = ssub.s32 %s22, %s29
      %p124 = scmp.eq.s32.totalorder %s123, 0
      %s126 = sadd.s32 %s125, 1
      %s127 = scalar_select %p124, %s125, %s126
      %p130 = pneg %p124
      %p131 = scmp.eq.s32.totalorder %s14, 8
      %p132 = por %p130, %p131
      %p133 = scmp.ne.s32.totalorder %s125, %s128
      %p134 = scmp.eq.s32.totalorder %s14, 0
      %p135 = por %p133, %p134
      %p136 = scmp.ne.s32.totalorder %s125, %s128
      %p137 = scmp.eq.s32.totalorder %s19, 8
      %p138 = por %p136, %p137
      %p139 = scmp.ne.s32.totalorder %s128, %s129
      %p140 = scmp.eq.s32.totalorder %s19, 0
      %p141 = por %p139, %p140
      %p142 = scmp.ne.s32.totalorder %s128, %s129
      %p143 = scmp.eq.s32.totalorder %s20, 8
      %p144 = por %p142, %p143
      %p146 = scmp.ne.s32.totalorder %s129, %s145
      %p147 = scmp.eq.s32.totalorder %s20, 0
      %p148 = por %p146, %p147
      %s150 = sadd.s32 %s149, 1
      %p153 = scmp.eq.s32.totalorder %s14, 8
      %p154 = scmp.ne.s32.totalorder %s149, %s151
      %p155 = scmp.eq.s32.totalorder %s14, 0
      %p156 = por %p154, %p155
      %p157 = scmp.ne.s32.totalorder %s149, %s151
      %p158 = scmp.eq.s32.totalorder %s19, 8
      %p159 = por %p157, %p158
      %p160 = scmp.ne.s32.totalorder %s151, %s152
      %p161 = scmp.eq.s32.totalorder %s19, 0
      %p162 = por %p160, %p161
      %p163 = scmp.ne.s32.totalorder %s151, %s152
      %p164 = scmp.eq.s32.totalorder %s20, 8
      %p165 = por %p163, %p164
      %p167 = scmp.ne.s32.totalorder %s152, %s166
      %p168 = scmp.eq.s32.totalorder %s20, 0
      %p169 = por %p167, %p168
      %p170 = scmp.le.s32.totalorder 1, %s14
      %p171 = scmp.lt.s32.totalorder %s14, 10
      %p172 = pnand %p170, %p171
      %p173 = pneg %p172
      // Predicated region
      $region9: #{point_loss.1} parent=5 // pred_check
        _
      $region10: #{point_loss.1} parent=5 // pred_check_branch
        %175 = sbr.rel (%p172) target = $region12
      $region11: #{point_loss.1} parent=5 // pred_region
        %s176 = ssub.s32 %s14, 1
        // Predicated region
        $region13: #{point_loss.1} parent=11 // pred_check
          %p177 = pneg %p47
        $region14: #{point_loss.1} parent=11 // pred_check_branch
          %179 = sbr.rel (%p177) target = $region16
        $region15: #{point_loss.1} parent=11 // pred_region
          %s181 = ssub.s32 16, 16
          %182 = vsyncadd [#allocation18], %s181
          %s184 = sshll.u32 %s0, 4
          %s185 = int_to_ptr.vmem [resolvable:$true] %s184
          %187 = dma.vmem_to_smem %s185, 16, [#allocation16], [#allocation18]
        $region16: #{point_loss.1} parent=11 // pred_fallthru
          _
        // Predicated region
        $region17: #{point_loss.1} parent=11 // pred_check
          %p188 = pneg %p68
        $region18: #{point_loss.1} parent=11 // pred_check_branch
          %190 = sbr.rel (%p188) target = $region20
        $region19: #{point_loss.1} parent=11 // pred_region
          _
        $region20: #{point_loss.1} parent=11 // pred_fallthru
          _
        // Predicated region
        $region21: #{point_loss.1} parent=11 // pred_check
          %p191 = pneg %p89
        $region22: #{point_loss.1} parent=11 // pred_check_branch
          %193 = sbr.rel (%p191) target = $region24
        $region23: #{point_loss.1} parent=11 // pred_region
          _
        $region24: #{point_loss.1} parent=11 // pred_fallthru
          _
      $region12: #{point_loss.1} parent=5 // pred_fallthru
        _
      %p194 = scmp.lt.s32.totalorder %s14, 9
      // Predicated region
      $region25: #{point_loss.1} parent=5 // pred_check
        %p195 = pneg %p194
      $region26: #{point_loss.1} parent=5 // pred_check_branch
        %197 = sbr.rel (%p195) target = $region28
      $region27: #{point_loss.1} parent=5 // pred_region
        // Predicated region
        $region29: #{point_loss.1} parent=27 // pred_check
          %p198 = pneg %p109
        $region30: #{point_loss.1} parent=27 // pred_check_branch
          %200 = sbr.rel (%p198) target = $region32
        $region31: #{point_loss.1} parent=27 // pred_region
          %s201 = smul.u32 16, %s21
          %p202 = scmp.lt.s32.totalorder %s201, 47
          %s203 = scalar_select %p202, %s201, 47
          %s204 = smul.addr %s203, 8
          %s205 = scalar_lea.vmem %s3, %s204
          %s206 = smul.u32 16, %s21
        $region32: #{point_loss.1} parent=27 // pred_fallthru
          _
        // Predicated region
        $region33: #{point_loss.1} parent=27 // pred_check
          %p207 = pneg %p135
        $region34: #{point_loss.1} parent=27 // pred_check_branch
          %209 = sbr.rel (%p207) target = $region36
        $region35: #{point_loss.1} parent=27 // pred_region
          %p210 = scmp.lt.s32.totalorder %s22, 2
          %s211 = scalar_select %p210, %s22, 2
          %s212 = smul.addr %s211, 8
          %s213 = scalar_lea.vmem %s4, %s212
        $region36: #{point_loss.1} parent=27 // pred_fallthru
          _
      $region28: #{point_loss.1} parent=5 // pred_fallthru
        _
      %p214 = scmp.le.s32.totalorder 1, %s14
      %p215 = scmp.lt.s32.totalorder %s14, 10
      %p216 = pnand %p214, %p215
      %p217 = pneg %p216
      // Predicated region
      $region37: #{point_loss.1} parent=5 // pred_check
        _
      $region38: #{point_loss.1} parent=5 // pred_check_branch
        %219 = sbr.rel (%p216) target = $region40
      $region39: #{point_loss.1} parent=5 // pred_region
        %s220 = ssub.s32 %s14, 1
        // Predicated region
        $region41: #{point_loss.1} parent=39 // pred_check
          %p221 = pneg %p47
        $region42: #{point_loss.1} parent=39 // pred_check_branch
          %223 = sbr.rel (%p221) target = $region44
        $region43: #{point_loss.1} parent=39 // pred_region
          %224 = dma.done [#allocation18], 16
        $region44: #{point_loss.1} parent=39 // pred_fallthru
          _
        %225 = sfence
        %p226 = pneg %p47
        %p227 = pneg %p44
        %p228 = pneg %p68
        %p229 = pneg %p65
        %p230 = pneg %p89
        %p231 = pneg %p86
        %s232 = smul.u32 16, %s23
        %p233 = scmp.lt.s32.totalorder %s232, 47
        %s234 = scalar_select %p233, %s232, 47
        %s235 = smul.addr %s234, 8
        %s236 = scalar_lea.vmem %s3, %s235
        %p237 = pneg %p115
        %p238 = pneg %p112
        %p239 = scmp.lt.s32.totalorder %s24, 2
        %s240 = scalar_select %p239, %s24, 2
        %s241 = smul.addr %s240, 8
        %s242 = scalar_lea.vmem %s4, %s241
        %p243 = pneg %p141
        %p244 = pneg %p138
        %p245 = pneg %p162
        %p246 = pneg %p159
        %s247 = smul.u32 16, %s23
        %p248 = scmp.lt.s32.totalorder %s247, 47
        %s249 = scalar_select %p248, %s247, 47
        %s250 = smul.addr %s249, 8
        %s251 = scalar_lea.vmem %s3, %s250
        %s252 = smul.u32 16, %s23
        %p253 = scmp.lt.s32.totalorder %s24, 2
        %s254 = scalar_select %p253, %s24, 2
        %s255 = smul.addr %s254, 8
        %s256 = scalar_lea.vmem %s4, %s255
        %s257 = sld [smem:[#allocation16]]
        %s258 = sld [smem:[#allocation16 + $0x1]]
        %s259 = sld [smem:[#allocation16 + $0x2]]
        %s260 = sld [smem:[#allocation16 + $0x3]]
        %s261 = sld [smem:[#allocation15]]
        %s262 = smul.u32 %s24, 128
        %p263 = scmp.eq.s32.totalorder %s23, 0
        %p264 = scmp.eq.s32.totalorder %s24, 0
        %p265 = pnand %p263, %p264
        %p266 = pneg %p265
        // Predicated region
        $region45: #{point_loss.1} parent=39 // pred_check
          _
        $region46: #{point_loss.1} parent=39 // pred_check_branch
          %268 = sbr.rel (%p265) target = $region48
        $region47: #{point_loss.1} parent=39 // pred_region
          %vm269 = vcmask 0
          %270 = vst.msk [vmem:[#allocation7] sm:$0x1] %vm269, 0.0
          %271 = vst.msk [vmem:[#allocation8] sm:$0x1] %vm269, 0.0
          %272 = vst.msk [vmem:[#allocation9] sm:$0x1] %vm269, 0.0
          %273 = vst.msk [vmem:[#allocation10] sm:$0x1] %vm269, 0.0
          %274 = vst.msk [vmem:[#allocation11] sm:$0x1] %vm269, 0.0
          %275 = vst.msk [vmem:[#allocation12] sm:$0x1] %vm269, 1e+30
          %276 = vst.msk [vmem:[#allocation13] sm:$0x1] %vm269, 0.0
          %277 = vst.msk [vmem:[#allocation14] sm:$0x1] %vm269, 1e+30
        $region48: #{point_loss.1} parent=39 // pred_fallthru
          _
        // Predicated region
        $region49: #{point_loss.1} parent=39 // pred_check
          %p278 = pneg %p264
        $region50: #{point_loss.1} parent=39 // pred_check_branch
          %280 = sbr.rel (%p278) target = $region52
        $region51: #{point_loss.1} parent=39 // pred_region
          %v281 = vld [vmem:[%s251] sm:$0xff]
          %v282 = vld [vmem:[%s251 + $0x8] sm:$0xff]
          %v283 = vld [vmem:[%s251 + $0x10] sm:$0xff]
          %v284 = vld [vmem:[%s251 + $0x18] sm:$0xff]
          %v285 = vld [vmem:[%s251 + $0x20] sm:$0xff]
          %v286 = vld [vmem:[%s251 + $0x28] sm:$0xff]
          %v287 = vld [vmem:[%s251 + $0x30] sm:$0xff]
          %v288 = vld [vmem:[%s251 + $0x38] sm:$0xff]
          %v289 = vld [vmem:[%s251 + $0x40] sm:$0xff]
          %v290 = vld [vmem:[%s251 + $0x48] sm:$0xff]
          %v291 = vld [vmem:[%s251 + $0x50] sm:$0xff]
          %v292 = vld [vmem:[%s251 + $0x58] sm:$0xff]
          %v293 = vld [vmem:[%s251 + $0x60] sm:$0xff]
          %v294 = vld [vmem:[%s251 + $0x68] sm:$0xff]
          %v295 = vld [vmem:[%s251 + $0x70] sm:$0xff]
          %v296 = vld [vmem:[%s251 + $0x78] sm:$0xff]
          %v297 = vstv %s257
          %v298 = vmul.f32 %v281, %v297
          %v299 = vmul.f32 %v282, %v297
          %v300 = vmul.f32 %v283, %v297
          %v301 = vmul.f32 %v284, %v297
          %v302 = vmul.f32 %v285, %v297
          %v303 = vmul.f32 %v286, %v297
          %v304 = vmul.f32 %v287, %v297
          %v305 = vmul.f32 %v288, %v297
          %v306 = vmul.f32 %v289, %v297
          %v307 = vmul.f32 %v290, %v297
          %v308 = vmul.f32 %v291, %v297
          %v309 = vmul.f32 %v292, %v297
          %v310 = vmul.f32 %v293, %v297
          %v311 = vmul.f32 %v294, %v297
          %v312 = vmul.f32 %v295, %v297
          %v313 = vmul.f32 %v296, %v297
          %v314 = vstv %s258
          %v315 = vmul.f32 %v281, %v314
          %v316 = vmul.f32 %v282, %v314
          %v317 = vmul.f32 %v283, %v314
          %v318 = vmul.f32 %v284, %v314
          %v319 = vmul.f32 %v285, %v314
          %v320 = vmul.f32 %v286, %v314
          %v321 = vmul.f32 %v287, %v314
          %v322 = vmul.f32 %v288, %v314
          %v323 = vmul.f32 %v289, %v314
          %v324 = vmul.f32 %v290, %v314
          %v325 = vmul.f32 %v291, %v314
          %v326 = vmul.f32 %v292, %v314
          %v327 = vmul.f32 %v293, %v314
          %v328 = vmul.f32 %v294, %v314
          %v329 = vmul.f32 %v295, %v314
          %v330 = vmul.f32 %v296, %v314
          %347 = vrot.lane.b32.xlu0 %v315, 127
          %v348 = vpop.permute.xlu0 %347
          %349 = vrot.lane.b32.xlu0 %v316, 127
          %v350 = vpop.permute.xlu0 %349
          %351 = vrot.lane.b32.xlu0 %v317, 127
          %v352 = vpop.permute.xlu0 %351
          %353 = vrot.lane.b32.xlu0 %v318, 127
          %v354 = vpop.permute.xlu0 %353
          %355 = vrot.lane.b32.xlu0 %v319, 127
          %v356 = vpop.permute.xlu0 %355
          %357 = vrot.lane.b32.xlu0 %v320, 127
          %v358 = vpop.permute.xlu0 %357
          %359 = vrot.lane.b32.xlu0 %v321, 127
          %v360 = vpop.permute.xlu0 %359
          %361 = vrot.lane.b32.xlu0 %v322, 127
          %v362 = vpop.permute.xlu0 %361
          %363 = vrot.lane.b32.xlu0 %v323, 127
          %v364 = vpop.permute.xlu0 %363
          %365 = vrot.lane.b32.xlu0 %v324, 127
          %v366 = vpop.permute.xlu0 %365
          %367 = vrot.lane.b32.xlu0 %v325, 127
          %v368 = vpop.permute.xlu0 %367
          %369 = vrot.lane.b32.xlu0 %v326, 127
          %v370 = vpop.permute.xlu0 %369
          %371 = vrot.lane.b32.xlu0 %v327, 127
          %v372 = vpop.permute.xlu0 %371
          %373 = vrot.lane.b32.xlu0 %v328, 127
          %v374 = vpop.permute.xlu0 %373
          %375 = vrot.lane.b32.xlu0 %v329, 127
          %v376 = vpop.permute.xlu0 %375
          %377 = vrot.lane.b32.xlu0 %v330, 127
          %v378 = vpop.permute.xlu0 %377
          %v395 = vadd.f32 %v298, %v348
          %v396 = vadd.f32 %v299, %v350
          %v397 = vadd.f32 %v300, %v352
          %v398 = vadd.f32 %v301, %v354
          %v399 = vadd.f32 %v302, %v356
          %v400 = vadd.f32 %v303, %v358
          %v401 = vadd.f32 %v304, %v360
          %v402 = vadd.f32 %v305, %v362
          %v403 = vadd.f32 %v306, %v364
          %v404 = vadd.f32 %v307, %v366
          %v405 = vadd.f32 %v308, %v368
          %v406 = vadd.f32 %v309, %v370
          %v407 = vadd.f32 %v310, %v372
          %v408 = vadd.f32 %v311, %v374
          %v409 = vadd.f32 %v312, %v376
          %v410 = vadd.f32 %v313, %v378
          %v411 = vstv %s259
          %v412 = vmul.f32 %v281, %v411
          %v413 = vmul.f32 %v282, %v411
          %v414 = vmul.f32 %v283, %v411
          %v415 = vmul.f32 %v284, %v411
          %v416 = vmul.f32 %v285, %v411
          %v417 = vmul.f32 %v286, %v411
          %v418 = vmul.f32 %v287, %v411
          %v419 = vmul.f32 %v288, %v411
          %v420 = vmul.f32 %v289, %v411
          %v421 = vmul.f32 %v290, %v411
          %v422 = vmul.f32 %v291, %v411
          %v423 = vmul.f32 %v292, %v411
          %v424 = vmul.f32 %v293, %v411
          %v425 = vmul.f32 %v294, %v411
          %v426 = vmul.f32 %v295, %v411
          %v427 = vmul.f32 %v296, %v411
          %444 = vrot.lane.b32.xlu0 %v412, 126
          %v445 = vpop.permute.xlu0 %444
          %446 = vrot.lane.b32.xlu0 %v413, 126
          %v447 = vpop.permute.xlu0 %446
          %448 = vrot.lane.b32.xlu0 %v414, 126
          %v449 = vpop.permute.xlu0 %448
          %450 = vrot.lane.b32.xlu0 %v415, 126
          %v451 = vpop.permute.xlu0 %450
          %452 = vrot.lane.b32.xlu0 %v416, 126
          %v453 = vpop.permute.xlu0 %452
          %454 = vrot.lane.b32.xlu0 %v417, 126
          %v455 = vpop.permute.xlu0 %454
          %456 = vrot.lane.b32.xlu0 %v418, 126
          %v457 = vpop.permute.xlu0 %456
          %458 = vrot.lane.b32.xlu0 %v419, 126
          %v459 = vpop.permute.xlu0 %458
          %460 = vrot.lane.b32.xlu0 %v420, 126
          %v461 = vpop.permute.xlu0 %460
          %462 = vrot.lane.b32.xlu0 %v421, 126
          %v463 = vpop.permute.xlu0 %462
          %464 = vrot.lane.b32.xlu0 %v422, 126
          %v465 = vpop.permute.xlu0 %464
          %466 = vrot.lane.b32.xlu0 %v423, 126
          %v467 = vpop.permute.xlu0 %466
          %468 = vrot.lane.b32.xlu0 %v424, 126
          %v469 = vpop.permute.xlu0 %468
          %470 = vrot.lane.b32.xlu0 %v425, 126
          %v471 = vpop.permute.xlu0 %470
          %472 = vrot.lane.b32.xlu0 %v426, 126
          %v473 = vpop.permute.xlu0 %472
          %474 = vrot.lane.b32.xlu0 %v427, 126
          %v475 = vpop.permute.xlu0 %474
          %v492 = vadd.f32 %v395, %v445
          %v493 = vadd.f32 %v396, %v447
          %v494 = vadd.f32 %v397, %v449
          %v495 = vadd.f32 %v398, %v451
          %v496 = vadd.f32 %v399, %v453
          %v497 = vadd.f32 %v400, %v455
          %v498 = vadd.f32 %v401, %v457
          %v499 = vadd.f32 %v402, %v459
          %v500 = vadd.f32 %v403, %v461
          %v501 = vadd.f32 %v404, %v463
          %v502 = vadd.f32 %v405, %v465
          %v503 = vadd.f32 %v406, %v467
          %v504 = vadd.f32 %v407, %v469
          %v505 = vadd.f32 %v408, %v471
          %v506 = vadd.f32 %v409, %v473
          %v507 = vadd.f32 %v410, %v475
          %v508 = vstv %s260
          %v509 = vadd.f32 %v492, %v508
          %v510 = vadd.f32 %v493, %v508
          %v511 = vadd.f32 %v494, %v508
          %v512 = vadd.f32 %v495, %v508
          %v513 = vadd.f32 %v496, %v508
          %v514 = vadd.f32 %v497, %v508
          %v515 = vadd.f32 %v498, %v508
          %v516 = vadd.f32 %v499, %v508
          %v517 = vadd.f32 %v500, %v508
          %v518 = vadd.f32 %v501, %v508
          %v519 = vadd.f32 %v502, %v508
          %v520 = vadd.f32 %v503, %v508
          %v521 = vadd.f32 %v504, %v508
          %v522 = vadd.f32 %v505, %v508
          %v523 = vadd.f32 %v506, %v508
          %v524 = vadd.f32 %v507, %v508
          %v525 = vmul.f32 %v509, -2.0
          %v526 = vmul.f32 %v510, -2.0
          %v527 = vmul.f32 %v511, -2.0
          %v528 = vmul.f32 %v512, -2.0
          %v529 = vmul.f32 %v513, -2.0
          %v530 = vmul.f32 %v514, -2.0
          %v531 = vmul.f32 %v515, -2.0
          %v532 = vmul.f32 %v516, -2.0
          %v533 = vmul.f32 %v517, -2.0
          %v534 = vmul.f32 %v518, -2.0
          %v535 = vmul.f32 %v519, -2.0
          %v536 = vmul.f32 %v520, -2.0
          %v537 = vmul.f32 %v521, -2.0
          %v538 = vmul.f32 %v522, -2.0
          %v539 = vmul.f32 %v523, -2.0
          %v540 = vmul.f32 %v524, -2.0
          %s541 = smul.u32 %s23, 128
          %v542 = vlaneseq
          %v543 = vshrl.u32 %v542, 7
          %v544 = vadd.s32 %v543, 8
          %v545 = vadd.s32 %v543, 16
          %v546 = vadd.s32 %v543, 24
          %v547 = vadd.s32 %v543, 32
          %v548 = vadd.s32 %v543, 40
          %v549 = vadd.s32 %v543, 48
          %v550 = vadd.s32 %v543, 56
          %v551 = vadd.s32 %v543, 64
          %v552 = vadd.s32 %v543, 72
          %v553 = vadd.s32 %v543, 80
          %v554 = vadd.s32 %v543, 88
          %v555 = vadd.s32 %v543, 96
          %v556 = vadd.s32 %v543, 104
          %v557 = vadd.s32 %v543, 112
          %v558 = vadd.s32 %v543, 120
          %v559 = vstv %s541
          %v560 = vadd.s32 %v559, %v543
          %v561 = vadd.s32 %v559, %v544
          %v562 = vadd.s32 %v559, %v545
          %v563 = vadd.s32 %v559, %v546
          %v564 = vadd.s32 %v559, %v547
          %v565 = vadd.s32 %v559, %v548
          %v566 = vadd.s32 %v559, %v549
          %v567 = vadd.s32 %v559, %v550
          %v568 = vadd.s32 %v559, %v551
          %v569 = vadd.s32 %v559, %v552
          %v570 = vadd.s32 %v559, %v553
          %v571 = vadd.s32 %v559, %v554
          %v572 = vadd.s32 %v559, %v555
          %v573 = vadd.s32 %v559, %v556
          %v574 = vadd.s32 %v559, %v557
          %v575 = vadd.s32 %v559, %v558
          %v576 = vstv %s261
          %vm577 = vcmp.lt.s32.totalorder %v560, %v576
          %vm578 = vcmp.lt.s32.totalorder %v561, %v576
          %vm579 = vcmp.lt.s32.totalorder %v562, %v576
          %vm580 = vcmp.lt.s32.totalorder %v563, %v576
          %vm581 = vcmp.lt.s32.totalorder %v564, %v576
          %vm582 = vcmp.lt.s32.totalorder %v565, %v576
          %vm583 = vcmp.lt.s32.totalorder %v566, %v576
          %vm584 = vcmp.lt.s32.totalorder %v567, %v576
          %vm585 = vcmp.lt.s32.totalorder %v568, %v576
          %vm586 = vcmp.lt.s32.totalorder %v569, %v576
          %vm587 = vcmp.lt.s32.totalorder %v570, %v576
          %vm588 = vcmp.lt.s32.totalorder %v571, %v576
          %vm589 = vcmp.lt.s32.totalorder %v572, %v576
          %vm590 = vcmp.lt.s32.totalorder %v573, %v576
          %vm591 = vcmp.lt.s32.totalorder %v574, %v576
          %vm592 = vcmp.lt.s32.totalorder %v575, %v576
          %vm593 = vcmp.gt.f32.partialorder %v525, 0.0
          %vm594 = vcmp.gt.f32.partialorder %v526, 0.0
          %vm595 = vcmp.gt.f32.partialorder %v527, 0.0
          %vm596 = vcmp.gt.f32.partialorder %v528, 0.0
          %vm597 = vcmp.gt.f32.partialorder %v529, 0.0
          %vm598 = vcmp.gt.f32.partialorder %v530, 0.0
          %vm599 = vcmp.gt.f32.partialorder %v531, 0.0
          %vm600 = vcmp.gt.f32.partialorder %v532, 0.0
          %vm601 = vcmp.gt.f32.partialorder %v533, 0.0
          %vm602 = vcmp.gt.f32.partialorder %v534, 0.0
          %vm603 = vcmp.gt.f32.partialorder %v535, 0.0
          %vm604 = vcmp.gt.f32.partialorder %v536, 0.0
          %vm605 = vcmp.gt.f32.partialorder %v537, 0.0
          %vm606 = vcmp.gt.f32.partialorder %v538, 0.0
          %vm607 = vcmp.gt.f32.partialorder %v539, 0.0
          %vm608 = vcmp.gt.f32.partialorder %v540, 0.0
          %vm609 = vmxor %vm593, 1
          %vm610 = vmxor %vm594, 1
          %vm611 = vmxor %vm595, 1
          %vm612 = vmxor %vm596, 1
          %vm613 = vmxor %vm597, 1
          %vm614 = vmxor %vm598, 1
          %vm615 = vmxor %vm599, 1
          %vm616 = vmxor %vm600, 1
          %vm617 = vmxor %vm601, 1
          %vm618 = vmxor %vm602, 1
          %vm619 = vmxor %vm603, 1
          %vm620 = vmxor %vm604, 1
          %vm621 = vmxor %vm605, 1
          %vm622 = vmxor %vm606, 1
          %vm623 = vmxor %vm607, 1
          %vm624 = vmxor %vm608, 1
          %vm625 = vmand %vm609, %vm577
          %vm626 = vmand %vm610, %vm578
          %vm627 = vmand %vm611, %vm579
          %vm628 = vmand %vm612, %vm580
          %vm629 = vmand %vm613, %vm581
          %vm630 = vmand %vm614, %vm582
          %vm631 = vmand %vm615, %vm583
          %vm632 = vmand %vm616, %vm584
          %vm633 = vmand %vm617, %vm585
          %vm634 = vmand %vm618, %vm586
          %vm635 = vmand %vm619, %vm587
          %vm636 = vmand %vm620, %vm588
          %vm637 = vmand %vm621, %vm589
          %vm638 = vmand %vm622, %vm590
          %vm639 = vmand %vm623, %vm591
          %vm640 = vmand %vm624, %vm592
          %v641 = vsel %vm625, 1, 0
          %v642 = vsel %vm626, 1, 0
          %v643 = vsel %vm627, 1, 0
          %v644 = vsel %vm628, 1, 0
          %v645 = vsel %vm629, 1, 0
          %v646 = vsel %vm630, 1, 0
          %v647 = vsel %vm631, 1, 0
          %v648 = vsel %vm632, 1, 0
          %v649 = vsel %vm633, 1, 0
          %v650 = vsel %vm634, 1, 0
          %v651 = vsel %vm635, 1, 0
          %v652 = vsel %vm636, 1, 0
          %v653 = vsel %vm637, 1, 0
          %v654 = vsel %vm638, 1, 0
          %v655 = vsel %vm639, 1, 0
          %v656 = vsel %vm640, 1, 0
          %v657 = vcvt.s32.f32 %v641
          %v658 = vcvt.s32.f32 %v642
          %v659 = vcvt.s32.f32 %v643
          %v660 = vcvt.s32.f32 %v644
          %v661 = vcvt.s32.f32 %v645
          %v662 = vcvt.s32.f32 %v646
          %v663 = vcvt.s32.f32 %v647
          %v664 = vcvt.s32.f32 %v648
          %v665 = vcvt.s32.f32 %v649
          %v666 = vcvt.s32.f32 %v650
          %v667 = vcvt.s32.f32 %v651
          %v668 = vcvt.s32.f32 %v652
          %v669 = vcvt.s32.f32 %v653
          %v670 = vcvt.s32.f32 %v654
          %v671 = vcvt.s32.f32 %v655
          %v672 = vcvt.s32.f32 %v656
          %v673 = vmul.f32 %v281, %v281
          %v674 = vmul.f32 %v282, %v282
          %v675 = vmul.f32 %v283, %v283
          %v676 = vmul.f32 %v284, %v284
          %v677 = vmul.f32 %v285, %v285
          %v678 = vmul.f32 %v286, %v286
          %v679 = vmul.f32 %v287, %v287
          %v680 = vmul.f32 %v288, %v288
          %v681 = vmul.f32 %v289, %v289
          %v682 = vmul.f32 %v290, %v290
          %v683 = vmul.f32 %v291, %v291
          %v684 = vmul.f32 %v292, %v292
          %v685 = vmul.f32 %v293, %v293
          %v686 = vmul.f32 %v294, %v294
          %v687 = vmul.f32 %v295, %v295
          %v688 = vmul.f32 %v296, %v296
          %705 = vrot.lane.b32.xlu0 %v673, 127
          %v706 = vpop.permute.xlu0 %705
          %707 = vrot.lane.b32.xlu0 %v674, 127
          %v708 = vpop.permute.xlu0 %707
          %709 = vrot.lane.b32.xlu0 %v675, 127
          %v710 = vpop.permute.xlu0 %709
          %711 = vrot.lane.b32.xlu0 %v676, 127
          %v712 = vpop.permute.xlu0 %711
          %713 = vrot.lane.b32.xlu0 %v677, 127
          %v714 = vpop.permute.xlu0 %713
          %715 = vrot.lane.b32.xlu0 %v678, 127
          %v716 = vpop.permute.xlu0 %715
          %717 = vrot.lane.b32.xlu0 %v679, 127
          %v718 = vpop.permute.xlu0 %717
          %719 = vrot.lane.b32.xlu0 %v680, 127
          %v720 = vpop.permute.xlu0 %719
          %721 = vrot.lane.b32.xlu0 %v681, 127
          %v722 = vpop.permute.xlu0 %721
          %723 = vrot.lane.b32.xlu0 %v682, 127
          %v724 = vpop.permute.xlu0 %723
          %725 = vrot.lane.b32.xlu0 %v683, 127
          %v726 = vpop.permute.xlu0 %725
          %727 = vrot.lane.b32.xlu0 %v684, 127
          %v728 = vpop.permute.xlu0 %727
          %729 = vrot.lane.b32.xlu0 %v685, 127
          %v730 = vpop.permute.xlu0 %729
          %731 = vrot.lane.b32.xlu0 %v686, 127
          %v732 = vpop.permute.xlu0 %731
          %733 = vrot.lane.b32.xlu0 %v687, 127
          %v734 = vpop.permute.xlu0 %733
          %735 = vrot.lane.b32.xlu0 %v688, 127
          %v736 = vpop.permute.xlu0 %735
          %v753 = vadd.f32 %v673, %v706
          %v754 = vadd.f32 %v674, %v708
          %v755 = vadd.f32 %v675, %v710
          %v756 = vadd.f32 %v676, %v712
          %v757 = vadd.f32 %v677, %v714
          %v758 = vadd.f32 %v678, %v716
          %v759 = vadd.f32 %v679, %v718
          %v760 = vadd.f32 %v680, %v720
          %v761 = vadd.f32 %v681, %v722
          %v762 = vadd.f32 %v682, %v724
          %v763 = vadd.f32 %v683, %v726
          %v764 = vadd.f32 %v684, %v728
          %v765 = vadd.f32 %v685, %v730
          %v766 = vadd.f32 %v686, %v732
          %v767 = vadd.f32 %v687, %v734
          %v768 = vadd.f32 %v688, %v736
          %769 = vrot.lane.b32.xlu0 %v673, 126
          %v770 = vpop.permute.xlu0 %769
          %771 = vrot.lane.b32.xlu0 %v674, 126
          %v772 = vpop.permute.xlu0 %771
          %773 = vrot.lane.b32.xlu0 %v675, 126
          %v774 = vpop.permute.xlu0 %773
          %775 = vrot.lane.b32.xlu0 %v676, 126
          %v776 = vpop.permute.xlu0 %775
          %777 = vrot.lane.b32.xlu0 %v677, 126
          %v778 = vpop.permute.xlu0 %777
          %779 = vrot.lane.b32.xlu0 %v678, 126
          %v780 = vpop.permute.xlu0 %779
          %781 = vrot.lane.b32.xlu0 %v679, 126
          %v782 = vpop.permute.xlu0 %781
          %783 = vrot.lane.b32.xlu0 %v680, 126
          %v784 = vpop.permute.xlu0 %783
          %785 = vrot.lane.b32.xlu0 %v681, 126
          %v786 = vpop.permute.xlu0 %785
          %787 = vrot.lane.b32.xlu0 %v682, 126
          %v788 = vpop.permute.xlu0 %787
          %789 = vrot.lane.b32.xlu0 %v683, 126
          %v790 = vpop.permute.xlu0 %789
          %791 = vrot.lane.b32.xlu0 %v684, 126
          %v792 = vpop.permute.xlu0 %791
          %793 = vrot.lane.b32.xlu0 %v685, 126
          %v794 = vpop.permute.xlu0 %793
          %795 = vrot.lane.b32.xlu0 %v686, 126
          %v796 = vpop.permute.xlu0 %795
          %797 = vrot.lane.b32.xlu0 %v687, 126
          %v798 = vpop.permute.xlu0 %797
          %799 = vrot.lane.b32.xlu0 %v688, 126
          %v800 = vpop.permute.xlu0 %799
          %v817 = vadd.f32 %v753, %v770
          %v818 = vadd.f32 %v754, %v772
          %v819 = vadd.f32 %v755, %v774
          %v820 = vadd.f32 %v756, %v776
          %v821 = vadd.f32 %v757, %v778
          %v822 = vadd.f32 %v758, %v780
          %v823 = vadd.f32 %v759, %v782
          %v824 = vadd.f32 %v760, %v784
          %v825 = vadd.f32 %v761, %v786
          %v826 = vadd.f32 %v762, %v788
          %v827 = vadd.f32 %v763, %v790
          %v828 = vadd.f32 %v764, %v792
          %v829 = vadd.f32 %v765, %v794
          %v830 = vadd.f32 %v766, %v796
          %v831 = vadd.f32 %v767, %v798
          %v832 = vadd.f32 %v768, %v800
          %v833 = vsel %vm625, 0.0, 1e+30
          %v834 = vsel %vm626, 0.0, 1e+30
          %v835 = vsel %vm627, 0.0, 1e+30
          %v836 = vsel %vm628, 0.0, 1e+30
          %v837 = vsel %vm629, 0.0, 1e+30
          %v838 = vsel %vm630, 0.0, 1e+30
          %v839 = vsel %vm631, 0.0, 1e+30
          %v840 = vsel %vm632, 0.0, 1e+30
          %v841 = vsel %vm633, 0.0, 1e+30
          %v842 = vsel %vm634, 0.0, 1e+30
          %v843 = vsel %vm635, 0.0, 1e+30
          %v844 = vsel %vm636, 0.0, 1e+30
          %v845 = vsel %vm637, 0.0, 1e+30
          %v846 = vsel %vm638, 0.0, 1e+30
          %v847 = vsel %vm639, 0.0, 1e+30
          %v848 = vsel %vm640, 0.0, 1e+30
          %v849 = vadd.f32 %v817, %v833
          %v850 = vadd.f32 %v818, %v834
          %v851 = vadd.f32 %v819, %v835
          %v852 = vadd.f32 %v820, %v836
          %v853 = vadd.f32 %v821, %v837
          %v854 = vadd.f32 %v822, %v838
          %v855 = vadd.f32 %v823, %v839
          %v856 = vadd.f32 %v824, %v840
          %v857 = vadd.f32 %v825, %v841
          %v858 = vadd.f32 %v826, %v842
          %v859 = vadd.f32 %v827, %v843
          %v860 = vadd.f32 %v828, %v844
          %v861 = vadd.f32 %v829, %v845
          %v862 = vadd.f32 %v830, %v846
          %v863 = vadd.f32 %v831, %v847
          %v864 = vadd.f32 %v832, %v848
          %v865 = vlaneseq
          %v866 = vand.u32 %v865, 127
          %vm867 = vcmp.eq.s32.totalorder %v866, 3
          %869 = vset.pattern.permute.xlu0 0
          %870 = vperm.xlu0 %869, %v849
          %v871 = vpop.permute.xlu0 %870
          %874 = vset.pattern.permute.xlu0 0
          %875 = vperm.xlu0 %874, %v850
          %v876 = vpop.permute.xlu0 %875
          %879 = vset.pattern.permute.xlu0 0
          %880 = vperm.xlu0 %879, %v851
          %v881 = vpop.permute.xlu0 %880
          %884 = vset.pattern.permute.xlu0 0
          %885 = vperm.xlu0 %884, %v852
          %v886 = vpop.permute.xlu0 %885
          %889 = vset.pattern.permute.xlu0 0
          %890 = vperm.xlu0 %889, %v853
          %v891 = vpop.permute.xlu0 %890
          %894 = vset.pattern.permute.xlu0 0
          %895 = vperm.xlu0 %894, %v854
          %v896 = vpop.permute.xlu0 %895
          %899 = vset.pattern.permute.xlu0 0
          %900 = vperm.xlu0 %899, %v855
          %v901 = vpop.permute.xlu0 %900
          %904 = vset.pattern.permute.xlu0 0
          %905 = vperm.xlu0 %904, %v856
          %v906 = vpop.permute.xlu0 %905
          %909 = vset.pattern.permute.xlu0 0
          %910 = vperm.xlu0 %909, %v857
          %v911 = vpop.permute.xlu0 %910
          %914 = vset.pattern.permute.xlu0 0
          %915 = vperm.xlu0 %914, %v858
          %v916 = vpop.permute.xlu0 %915
          %919 = vset.pattern.permute.xlu0 0
          %920 = vperm.xlu0 %919, %v859
          %v921 = vpop.permute.xlu0 %920
          %924 = vset.pattern.permute.xlu0 0
          %925 = vperm.xlu0 %924, %v860
          %v926 = vpop.permute.xlu0 %925
          %929 = vset.pattern.permute.xlu0 0
          %930 = vperm.xlu0 %929, %v861
          %v931 = vpop.permute.xlu0 %930
          %934 = vset.pattern.permute.xlu0 0
          %935 = vperm.xlu0 %934, %v862
          %v936 = vpop.permute.xlu0 %935
          %939 = vset.pattern.permute.xlu0 0
          %940 = vperm.xlu0 %939, %v863
          %v941 = vpop.permute.xlu0 %940
          %944 = vset.pattern.permute.xlu0 0
          %945 = vperm.xlu0 %944, %v864
          %v946 = vpop.permute.xlu0 %945
          %v948 = vsel %vm867, %v871, %v281
          %v949 = vsel %vm867, %v876, %v282
          %v950 = vsel %vm867, %v881, %v283
          %v951 = vsel %vm867, %v886, %v284
          %v952 = vsel %vm867, %v891, %v285
          %v953 = vsel %vm867, %v896, %v286
          %v954 = vsel %vm867, %v901, %v287
          %v955 = vsel %vm867, %v906, %v288
          %v956 = vsel %vm867, %v911, %v289
          %v957 = vsel %vm867, %v916, %v290
          %v958 = vsel %vm867, %v921, %v291
          %v959 = vsel %vm867, %v926, %v292
          %v960 = vsel %vm867, %v931, %v293
          %v961 = vsel %vm867, %v936, %v294
          %v962 = vsel %vm867, %v941, %v295
          %v963 = vsel %vm867, %v946, %v296
          %vm964 = vcmp.eq.s32.totalorder %v866, 4
          %v965 = vsel %vm964, 1.0, %v948
          %v966 = vsel %vm964, 1.0, %v949
          %v967 = vsel %vm964, 1.0, %v950
          %v968 = vsel %vm964, 1.0, %v951
          %v969 = vsel %vm964, 1.0, %v952
          %v970 = vsel %vm964, 1.0, %v953
          %v971 = vsel %vm964, 1.0, %v954
          %v972 = vsel %vm964, 1.0, %v955
          %v973 = vsel %vm964, 1.0, %v956
          %v974 = vsel %vm964, 1.0, %v957
          %v975 = vsel %vm964, 1.0, %v958
          %v976 = vsel %vm964, 1.0, %v959
          %v977 = vsel %vm964, 1.0, %v960
          %v978 = vsel %vm964, 1.0, %v961
          %v979 = vsel %vm964, 1.0, %v962
          %v980 = vsel %vm964, 1.0, %v963
          %vm981 = vcmask 64512
          %982 = vst.msk [vmem:[#allocation2] sm:$0xff] %vm981, %v965
          %983 = vst.msk [vmem:[#allocation2 + $0x8] sm:$0xff] %vm981, %v966
          %984 = vst.msk [vmem:[#allocation2 + $0x10] sm:$0xff] %vm981, %v967
          %985 = vst.msk [vmem:[#allocation2 + $0x18] sm:$0xff] %vm981, %v968
          %986 = vst.msk [vmem:[#allocation2 + $0x20] sm:$0xff] %vm981, %v969
          %987 = vst.msk [vmem:[#allocation2 + $0x28] sm:$0xff] %vm981, %v970
          %988 = vst.msk [vmem:[#allocation2 + $0x30] sm:$0xff] %vm981, %v971
          %989 = vst.msk [vmem:[#allocation2 + $0x38] sm:$0xff] %vm981, %v972
          %990 = vst.msk [vmem:[#allocation2 + $0x40] sm:$0xff] %vm981, %v973
          %991 = vst.msk [vmem:[#allocation2 + $0x48] sm:$0xff] %vm981, %v974
          %992 = vst.msk [vmem:[#allocation2 + $0x50] sm:$0xff] %vm981, %v975
          %993 = vst.msk [vmem:[#allocation2 + $0x58] sm:$0xff] %vm981, %v976
          %994 = vst.msk [vmem:[#allocation2 + $0x60] sm:$0xff] %vm981, %v977
          %995 = vst.msk [vmem:[#allocation2 + $0x68] sm:$0xff] %vm981, %v978
          %996 = vst.msk [vmem:[#allocation2 + $0x70] sm:$0xff] %vm981, %v979
          %997 = vst.msk [vmem:[#allocation2 + $0x78] sm:$0xff] %vm981, %v980
          %vm998 = vcmask 7168
          %999 = vst.msk [vmem:[#allocation3] sm:$0xff] %vm998, %v657
          %1000 = vst.msk [vmem:[#allocation3 + $0x8] sm:$0xff] %vm998, %v658
          %1001 = vst.msk [vmem:[#allocation3 + $0x10] sm:$0xff] %vm998, %v659
          %1002 = vst.msk [vmem:[#allocation3 + $0x18] sm:$0xff] %vm998, %v660
          %1003 = vst.msk [vmem:[#allocation3 + $0x20] sm:$0xff] %vm998, %v661
          %1004 = vst.msk [vmem:[#allocation3 + $0x28] sm:$0xff] %vm998, %v662
          %1005 = vst.msk [vmem:[#allocation3 + $0x30] sm:$0xff] %vm998, %v663
          %1006 = vst.msk [vmem:[#allocation3 + $0x38] sm:$0xff] %vm998, %v664
          %1007 = vst.msk [vmem:[#allocation3 + $0x40] sm:$0xff] %vm998, %v665
          %1008 = vst.msk [vmem:[#allocation3 + $0x48] sm:$0xff] %vm998, %v666
          %1009 = vst.msk [vmem:[#allocation3 + $0x50] sm:$0xff] %vm998, %v667
          %1010 = vst.msk [vmem:[#allocation3 + $0x58] sm:$0xff] %vm998, %v668
          %1011 = vst.msk [vmem:[#allocation3 + $0x60] sm:$0xff] %vm998, %v669
          %1012 = vst.msk [vmem:[#allocation3 + $0x68] sm:$0xff] %vm998, %v670
          %1013 = vst.msk [vmem:[#allocation3 + $0x70] sm:$0xff] %vm998, %v671
          %1014 = vst.msk [vmem:[#allocation3 + $0x78] sm:$0xff] %vm998, %v672
          %1015 = vst.msk [vmem:[#allocation5] sm:$0xff] %vm998, 1e+30
          %1016 = vst.msk [vmem:[#allocation5 + $0x8] sm:$0xff] %vm998, 1e+30
          %1017 = vst.msk [vmem:[#allocation5 + $0x10] sm:$0xff] %vm998, 1e+30
          %1018 = vst.msk [vmem:[#allocation5 + $0x18] sm:$0xff] %vm998, 1e+30
          %1019 = vst.msk [vmem:[#allocation5 + $0x20] sm:$0xff] %vm998, 1e+30
          %1020 = vst.msk [vmem:[#allocation5 + $0x28] sm:$0xff] %vm998, 1e+30
          %1021 = vst.msk [vmem:[#allocation5 + $0x30] sm:$0xff] %vm998, 1e+30
          %1022 = vst.msk [vmem:[#allocation5 + $0x38] sm:$0xff] %vm998, 1e+30
          %1023 = vst.msk [vmem:[#allocation5 + $0x40] sm:$0xff] %vm998, 1e+30
          %1024 = vst.msk [vmem:[#allocation5 + $0x48] sm:$0xff] %vm998, 1e+30
          %1025 = vst.msk [vmem:[#allocation5 + $0x50] sm:$0xff] %vm998, 1e+30
          %1026 = vst.msk [vmem:[#allocation5 + $0x58] sm:$0xff] %vm998, 1e+30
          %1027 = vst.msk [vmem:[#allocation5 + $0x60] sm:$0xff] %vm998, 1e+30
          %1028 = vst.msk [vmem:[#allocation5 + $0x68] sm:$0xff] %vm998, 1e+30
          %1029 = vst.msk [vmem:[#allocation5 + $0x70] sm:$0xff] %vm998, 1e+30
          %1030 = vst.msk [vmem:[#allocation5 + $0x78] sm:$0xff] %vm998, 1e+30
          %v1031 = vld [vmem:[#allocation10] sm:$0x1]
          %v1032 = vsel %vm998, %v657, 0.0
          %v1033 = vsel %vm998, %v658, 0.0
          %v1034 = vadd.f32 %v1032, %v1033
          %v1035 = vsel %vm998, %v659, 0.0
          %v1036 = vadd.f32 %v1034, %v1035
          %v1037 = vsel %vm998, %v660, 0.0
          %v1038 = vadd.f32 %v1036, %v1037
          %v1039 = vsel %vm998, %v661, 0.0
          %v1040 = vadd.f32 %v1038, %v1039
          %v1041 = vsel %vm998, %v662, 0.0
          %v1042 = vadd.f32 %v1040, %v1041
          %v1043 = vsel %vm998, %v663, 0.0
          %v1044 = vadd.f32 %v1042, %v1043
          %v1045 = vsel %vm998, %v664, 0.0
          %v1046 = vadd.f32 %v1044, %v1045
          %v1047 = vsel %vm998, %v665, 0.0
          %v1048 = vadd.f32 %v1046, %v1047
          %v1049 = vsel %vm998, %v666, 0.0
          %v1050 = vadd.f32 %v1048, %v1049
          %v1051 = vsel %vm998, %v667, 0.0
          %v1052 = vadd.f32 %v1050, %v1051
          %v1053 = vsel %vm998, %v668, 0.0
          %v1054 = vadd.f32 %v1052, %v1053
          %v1055 = vsel %vm998, %v669, 0.0
          %v1056 = vadd.f32 %v1054, %v1055
          %v1057 = vsel %vm998, %v670, 0.0
          %v1058 = vadd.f32 %v1056, %v1057
          %v1059 = vsel %vm998, %v671, 0.0
          %v1060 = vadd.f32 %v1058, %v1059
          %v1061 = vsel %vm998, %v672, 0.0
          %v1062 = vadd.f32 %v1060, %v1061
          %1063 = vadd.xlane.f32.xlu0 %v1062
          %v1064 = vpop.xlane.xlu0 %1063
          %v1065 = vrot.slane %v1064, 4
          %v1066 = vadd.f32 %v1064, %v1065
          %v1067 = vrot.slane %v1066, 2
          %v1068 = vadd.f32 %v1066, %v1067
          %v1069 = vrot.slane %v1068, 1
          %v1070 = vadd.f32 %v1068, %v1069
          %s1071 = vtos %v1070
          %v1072 = vstv %s1071
          %v1073 = vadd.f32 %v1031, %v1072
          %vm1074 = vcmask 0
          %1075 = vst.msk [vmem:[#allocation10] sm:$0x1] %vm1074, %v1073
          %v1076 = vld [vmem:[#allocation11] sm:$0x1]
          %v1077 = vmul.f32 %v657, %v817
          %v1078 = vmul.f32 %v658, %v818
          %v1079 = vmul.f32 %v659, %v819
          %v1080 = vmul.f32 %v660, %v820
          %v1081 = vmul.f32 %v661, %v821
          %v1082 = vmul.f32 %v662, %v822
          %v1083 = vmul.f32 %v663, %v823
          %v1084 = vmul.f32 %v664, %v824
          %v1085 = vmul.f32 %v665, %v825
          %v1086 = vmul.f32 %v666, %v826
          %v1087 = vmul.f32 %v667, %v827
          %v1088 = vmul.f32 %v668, %v828
          %v1089 = vmul.f32 %v669, %v829
          %v1090 = vmul.f32 %v670, %v830
          %v1091 = vmul.f32 %v671, %v831
          %v1092 = vmul.f32 %v672, %v832
          %v1093 = vsel %vm998, %v1077, 0.0
          %v1094 = vsel %vm998, %v1078, 0.0
          %v1095 = vadd.f32 %v1093, %v1094
          %v1096 = vsel %vm998, %v1079, 0.0
          %v1097 = vadd.f32 %v1095, %v1096
          %v1098 = vsel %vm998, %v1080, 0.0
          %v1099 = vadd.f32 %v1097, %v1098
          %v1100 = vsel %vm998, %v1081, 0.0
          %v1101 = vadd.f32 %v1099, %v1100
          %v1102 = vsel %vm998, %v1082, 0.0
          %v1103 = vadd.f32 %v1101, %v1102
          %v1104 = vsel %vm998, %v1083, 0.0
          %v1105 = vadd.f32 %v1103, %v1104
          %v1106 = vsel %vm998, %v1084, 0.0
          %v1107 = vadd.f32 %v1105, %v1106
          %v1108 = vsel %vm998, %v1085, 0.0
          %v1109 = vadd.f32 %v1107, %v1108
          %v1110 = vsel %vm998, %v1086, 0.0
          %v1111 = vadd.f32 %v1109, %v1110
          %v1112 = vsel %vm998, %v1087, 0.0
          %v1113 = vadd.f32 %v1111, %v1112
          %v1114 = vsel %vm998, %v1088, 0.0
          %v1115 = vadd.f32 %v1113, %v1114
          %v1116 = vsel %vm998, %v1089, 0.0
          %v1117 = vadd.f32 %v1115, %v1116
          %v1118 = vsel %vm998, %v1090, 0.0
          %v1119 = vadd.f32 %v1117, %v1118
          %v1120 = vsel %vm998, %v1091, 0.0
          %v1121 = vadd.f32 %v1119, %v1120
          %v1122 = vsel %vm998, %v1092, 0.0
          %v1123 = vadd.f32 %v1121, %v1122
          %1124 = vadd.xlane.f32.xlu0 %v1123
          %v1125 = vpop.xlane.xlu0 %1124
          %v1126 = vrot.slane %v1125, 4
          %v1127 = vadd.f32 %v1125, %v1126
          %v1128 = vrot.slane %v1127, 2
          %v1129 = vadd.f32 %v1127, %v1128
          %v1130 = vrot.slane %v1129, 1
          %v1131 = vadd.f32 %v1129, %v1130
          %s1132 = vtos %v1131
          %v1133 = vstv %s1132
          %v1134 = vadd.f32 %v1076, %v1133
          %1135 = vst.msk [vmem:[#allocation11] sm:$0x1] %vm1074, %v1134
          %v1136 = vld [vmem:[#allocation12] sm:$0x1]
          %v1137 = vsel %vm625, %v817, 1e+30
          %v1138 = vsel %vm626, %v818, 1e+30
          %v1139 = vsel %vm627, %v819, 1e+30
          %v1140 = vsel %vm628, %v820, 1e+30
          %v1141 = vsel %vm629, %v821, 1e+30
          %v1142 = vsel %vm630, %v822, 1e+30
          %v1143 = vsel %vm631, %v823, 1e+30
          %v1144 = vsel %vm632, %v824, 1e+30
          %v1145 = vsel %vm633, %v825, 1e+30
          %v1146 = vsel %vm634, %v826, 1e+30
          %v1147 = vsel %vm635, %v827, 1e+30
          %v1148 = vsel %vm636, %v828, 1e+30
          %v1149 = vsel %vm637, %v829, 1e+30
          %v1150 = vsel %vm638, %v830, 1e+30
          %v1151 = vsel %vm639, %v831, 1e+30
          %v1152 = vsel %vm640, %v832, 1e+30
          %v1153 = vsel %vm998, %v1137, inf
          %v1154 = vsel %vm998, %v1138, inf
          %v1155 = vsel %vm998, %v1139, inf
          %v1156 = vsel %vm998, %v1140, inf
          %v1157 = vsel %vm998, %v1141, inf
          %v1158 = vmin.f32 %v1153, %v1157
          %v1159 = vsel %vm998, %v1142, inf
          %v1160 = vmin.f32 %v1154, %v1159
          %v1161 = vsel %vm998, %v1143, inf
          %v1162 = vmin.f32 %v1155, %v1161
          %v1163 = vsel %vm998, %v1144, inf
          %v1164 = vmin.f32 %v1156, %v1163
          %v1165 = vsel %vm998, %v1145, inf
          %v1166 = vmin.f32 %v1158, %v1165
          %v1167 = vsel %vm998, %v1146, inf
          %v1168 = vmin.f32 %v1160, %v1167
          %v1169 = vsel %vm998, %v1147, inf
          %v1170 = vmin.f32 %v1162, %v1169
          %v1171 = vsel %vm998, %v1148, inf
          %v1172 = vmin.f32 %v1164, %v1171
          %v1173 = vsel %vm998, %v1149, inf
          %v1174 = vmin.f32 %v1166, %v1173
          %v1175 = vsel %vm998, %v1150, inf
          %v1176 = vmin.f32 %v1168, %v1175
          %v1177 = vsel %vm998, %v1151, inf
          %v1178 = vmin.f32 %v1170, %v1177
          %v1179 = vsel %vm998, %v1152, inf
          %v1180 = vmin.f32 %v1172, %v1179
          %v1181 = vmin.f32 %v1174, %v1176
          %v1182 = vmin.f32 %v1178, %v1180
          %v1183 = vmin.f32 %v1181, %v1182
          %1184 = vmin.xlane.f32.xlu0 %v1183
          %v1185 = vpop.xlane.xlu0 %1184
          %v1186 = vrot.slane %v1185, 4
          %v1187 = vmin.f32 %v1185, %v1186
          %v1188 = vrot.slane %v1187, 2
          %v1189 = vmin.f32 %v1187, %v1188
          %v1190 = vrot.slane %v1189, 1
          %v1191 = vmin.f32 %v1189, %v1190
          %s1192 = vtos %v1191
          %v1193 = vstv %s1192
          %v1194 = vmin.f32 %v1136, %v1193
          %1195 = vst.msk [vmem:[#allocation12] sm:$0x1] %vm1074, %v1194
        $region52: #{point_loss.1} parent=39 // pred_fallthru
          _
        // Predicated region
        $region53: #{point_loss.1} parent=39 // pred_check
          %p1196 = pneg %p263
        $region54: #{point_loss.1} parent=39 // pred_check_branch
          %1198 = sbr.rel (%p1196) target = $region56
        $region55: #{point_loss.1} parent=39 // pred_region
          %v1199 = vld [vmem:[%s256] sm:$0xff]
          %v1200 = vstv %s257
          %v1201 = vmul.f32 %v1200, %v1199
          %v1202 = vstv %s258
          %v1203 = vmul.f32 %v1202, %v1199
          %v1205 = vrot.slane %v1203, 1
          %v1207 = vadd.f32 %v1201, %v1205
          %v1208 = vstv %s259
          %v1209 = vmul.f32 %v1208, %v1199
          %v1211 = vrot.slane %v1209, 2
          %v1213 = vadd.f32 %v1207, %v1211
          %v1214 = vstv %s260
          %v1215 = vadd.f32 %v1213, %v1214
          %v1216 = vmul.f32 %v1215, -2.0
          %v1217 = vld [vmem:[%s2] sm:$0xff]
          %v1218 = vmul.f32 %v1217, %v1217
          %vm1219 = vcmask 7168
          %v1220 = vsel %vm1219, %v1218, 0.0
          %1221 = vadd.xlane.f32.xlu0 %v1220
          %v1222 = vpop.xlane.xlu0 %1221
          %v1223 = vrot.slane %v1222, 4
          %v1224 = vadd.f32 %v1222, %v1223
          %v1225 = vrot.slane %v1224, 2
          %v1226 = vadd.f32 %v1224, %v1225
          %v1227 = vrot.slane %v1226, 1
          %v1228 = vadd.f32 %v1226, %v1227
          %s1229 = vtos %v1228
          %v1230 = vstv %s1229
          %v1231 = vrcp.pop %v1230
          %v1232 = vmul.f32 %v1216, %v1231
          %v1233 = vlaneseq
          %v1234 = vshrl.u32 %v1233, 7
          %v1235 = vsub.s32 0, %v1234
          %v1236 = vrot.slane %v1232, %v1235
          %1238 = vset.pattern.permute.xlu0 0
          %1239 = vperm.xlu0 %1238, %v1217
          %v1240 = vpop.permute.xlu0 %1239
          %v1242 = vmul.f32 %v1236, %v1240
          %v1243 = vadd.f32 %v1199, %v1242
          %v1244 = vmul.f32 %v1243, %v1243
          %v1246 = vrot.slane %v1244, 1
          %v1248 = vadd.f32 %v1244, %v1246
          %v1249 = vrot.slane %v1244, 2
          %v1251 = vadd.f32 %v1248, %v1249
          %v1252 = vlaneseq
          %v1253 = vand.u32 %v1252, 127
          %v1254 = vstv %s262
          %v1255 = vadd.s32 %v1254, %v1253
          %v1256 = vstv %s261
          %vm1257 = vcmp.lt.s32.totalorder %v1255, %v1256
          %vm1258 = vcmp.gt.f32.partialorder %v1216, 0.0
          %vm1259 = vmand %vm1258, %vm1257
          %v1260 = vsel %vm1259, 0.0, 1e+30
          %v1261 = vadd.f32 %v1251, %v1260
          %v1262 = vlaneseq
          %v1263 = vshrl.u32 %v1262, 7
          %vm1264 = vcmp.lt.s32.totalorder %v1263, 3
          %v1265 = vmul.f32 %v1243, -2.0
          %v1266 = vsel %vm1264, %v1265, 0.0
          %vm1267 = vcmp.eq.s32.totalorder %v1263, 3
          %v1268 = vsel %vm1267, 1.0, %v1266
          %vm1269 = vcmp.eq.s32.totalorder %v1263, 4
          %v1270 = vlaneseq
          %v1271 = vshrl.u32 %v1270, 7
          %v1272 = vsub.s32 0, %v1271
          %v1273 = vrot.slane %v1261, %v1272
          %v1274 = vsel %vm1269, %v1273, %v1268
          %s1275 = sshra.s32 %s262, 7
          %s1276 = sand.u32 %s262, 127
          %s1277 = smul.addr %s1275, 8
          %s1278 = scalar_lea.vmem [#allocation4], %s1277
          %1279 = vst [vmem:[%s1278] sm:$0xff] %v1274
          %s1280 = scalar_lea.vmem [#allocation6], %s1275
          %v1281 = vlaneseq
          %vm1282 = vcmp.ge.s32.totalorder %v1281, 0
          %vm1283 = vcmp.lt.s32.totalorder %v1281, 128
          %vm1284 = vmand %vm1282, %vm1283
          %1285 = vst.msk [vmem:[%s1280] sm:$0x1] %vm1284, 1e+30
          %v1286 = vsel %vm1259, 1, 0
          %v1287 = vcvt.s32.f32 %v1286
          %v1288 = vld [vmem:[#allocation9] sm:$0x1]
          %vm1289 = vcmask 1040384
          %v1290 = vsel %vm1289, %v1287, 0.0
          %1291 = vadd.xlane.f32.xlu0 %v1290
          %v1292 = vpop.xlane.xlu0 %1291
          %v1293 = vrot.slane %v1292, 4
          %v1294 = vadd.f32 %v1292, %v1293
          %v1295 = vrot.slane %v1294, 2
          %v1296 = vadd.f32 %v1294, %v1295
          %v1297 = vrot.slane %v1296, 1
          %v1298 = vadd.f32 %v1296, %v1297
          %s1299 = vtos %v1298
          %v1300 = vstv %s1299
          %v1301 = vadd.f32 %v1288, %v1300
          %vm1302 = vcmask 0
          %1303 = vst.msk [vmem:[#allocation9] sm:$0x1] %vm1302, %v1301
          %v1304 = vld [vmem:[#allocation13] sm:$0x1]
          %v1305 = vmul.f32 %v1287, %v1251
          %v1306 = vsel %vm1289, %v1305, 0.0
          %1307 = vadd.xlane.f32.xlu0 %v1306
          %v1308 = vpop.xlane.xlu0 %1307
          %v1309 = vrot.slane %v1308, 4
          %v1310 = vadd.f32 %v1308, %v1309
          %v1311 = vrot.slane %v1310, 2
          %v1312 = vadd.f32 %v1310, %v1311
          %v1313 = vrot.slane %v1312, 1
          %v1314 = vadd.f32 %v1312, %v1313
          %s1315 = vtos %v1314
          %v1316 = vstv %s1315
          %v1317 = vadd.f32 %v1304, %v1316
          %1318 = vst.msk [vmem:[#allocation13] sm:$0x1] %vm1302, %v1317
          %v1319 = vld [vmem:[#allocation14] sm:$0x1]
          %v1320 = vsel %vm1259, %v1251, 1e+30
          %v1321 = vsel %vm1289, %v1320, inf
          %1322 = vmin.xlane.f32.xlu0 %v1321
          %v1323 = vpop.xlane.xlu0 %1322
          %v1324 = vrot.slane %v1323, 4
          %v1325 = vmin.f32 %v1323, %v1324
          %v1326 = vrot.slane %v1325, 2
          %v1327 = vmin.f32 %v1325, %v1326
          %v1328 = vrot.slane %v1327, 1
          %v1329 = vmin.f32 %v1327, %v1328
          %s1330 = vtos %v1329
          %v1331 = vstv %s1330
          %v1332 = vmin.f32 %v1319, %v1331
          %1333 = vst.msk [vmem:[#allocation14] sm:$0x1] %vm1302, %v1332
        $region56: #{point_loss.1} parent=39 // pred_fallthru
          _
        %v1334 = vld [vmem:[#allocation2] sm:$0xff]
        %v1335 = vld [vmem:[#allocation2 + $0x8] sm:$0xff]
        %v1336 = vld [vmem:[#allocation2 + $0x10] sm:$0xff]
        %v1337 = vld [vmem:[#allocation2 + $0x18] sm:$0xff]
        %v1338 = vld [vmem:[#allocation2 + $0x20] sm:$0xff]
        %v1339 = vld [vmem:[#allocation2 + $0x28] sm:$0xff]
        %v1340 = vld [vmem:[#allocation2 + $0x30] sm:$0xff]
        %v1341 = vld [vmem:[#allocation2 + $0x38] sm:$0xff]
        %v1342 = vld [vmem:[#allocation2 + $0x40] sm:$0xff]
        %v1343 = vld [vmem:[#allocation2 + $0x48] sm:$0xff]
        %v1344 = vld [vmem:[#allocation2 + $0x50] sm:$0xff]
        %v1345 = vld [vmem:[#allocation2 + $0x58] sm:$0xff]
        %v1346 = vld [vmem:[#allocation2 + $0x60] sm:$0xff]
        %v1347 = vld [vmem:[#allocation2 + $0x68] sm:$0xff]
        %v1348 = vld [vmem:[#allocation2 + $0x70] sm:$0xff]
        %v1349 = vld [vmem:[#allocation2 + $0x78] sm:$0xff]
        %s1350 = sshra.s32 %s262, 7
        %s1351 = sand.u32 %s262, 127
        %s1352 = smul.addr %s1350, 8
        %s1353 = scalar_lea.vmem [#allocation4], %s1352
        %v1354 = vld [vmem:[%s1353] sm:$0xff]
        %vm1355 = vcmask 64512
        %v1357 = vsel %vm1355, %v1334, 0
        %v1360 = vsel %vm1355, %v1335, 0
        %v1363 = vsel %vm1355, %v1336, 0
        %v1366 = vsel %vm1355, %v1337, 0
        %v1369 = vsel %vm1355, %v1338, 0
        %v1372 = vsel %vm1355, %v1339, 0
        %v1375 = vsel %vm1355, %v1340, 0
        %v1378 = vsel %vm1355, %v1341, 0
        %v1381 = vsel %vm1355, %v1342, 0
        %v1384 = vsel %vm1355, %v1343, 0
        %v1387 = vsel %vm1355, %v1344, 0
        %v1390 = vsel %vm1355, %v1345, 0
        %v1393 = vsel %vm1355, %v1346, 0
        %v1396 = vsel %vm1355, %v1347, 0
        %v1399 = vsel %vm1355, %v1348, 0
        %v1402 = vsel %vm1355, %v1349, 0
        %1404 = vmatprep.subr.mxu0 0.0
        %1405 = vmatpush1.msra.mxu0 0.0
        %1406 = vmatprep.subr.mxu0 0.0
        %1407 = vmatpush1.msra.mxu0 0.0
        %1408 = vmatprep.subr.mxu0 0.0
        %1409 = vmatpush1.msra.mxu0 0.0
        %1410 = vmatprep.subr.mxu0 0.0
        %1411 = vmatpush1.msra.mxu0 0.0
        %1412 = vmatprep.subr.mxu0 0.0
        %1413 = vmatpush1.msra.mxu0 0.0
        %1414 = vmatprep.subr.mxu0 0.0
        %1415 = vmatpush1.msra.mxu0 0.0
        %1416 = vmatprep.subr.mxu0 0.0
        %1417 = vmatpush1.msra.mxu0 0.0
        %1418 = vmatprep.subr.mxu0 0.0
        %1419 = vmatpush1.msra.mxu0 0.0
        %1420 = vmatprep.subr.mxu0 0.0
        %1421 = vmatpush1.msra.mxu0 0.0
        %1422 = vmatprep.subr.mxu0 0.0
        %1423 = vmatpush1.msra.mxu0 0.0
        %1424 = vmatprep.subr.mxu0 0.0
        %1425 = vmatpush1.msra.mxu0 0.0
        %1426 = vmatprep.subr.mxu0 0.0
        %1427 = vmatpush1.msra.mxu0 0.0
        %1428 = vmatprep.subr.mxu0 0.0
        %1429 = vmatpush1.msra.mxu0 0.0
        %1430 = vmatprep.subr.mxu0 0.0
        %1431 = vmatpush1.msra.mxu0 0.0
        %1432 = vmatprep.subr.mxu0 0.0
        %1433 = vmatpush1.msra.mxu0 0.0
        %1434 = vmatprep.subr.mxu0 0.0
        %1435 = vmatpush1.msra.mxu0 %v1354
        %1436 = vmatprep.subr.mxu0 0.0
        %1437 = vmatpush2.msra.mxu0 0.0
        %1438 = vmatprep.subr.mxu0 0.0
        %1439 = vmatpush2.msra.mxu0 0.0
        %1440 = vmatprep.subr.mxu0 0.0
        %1441 = vmatpush2.msra.mxu0 0.0
        %1442 = vmatprep.subr.mxu0 0.0
        %1443 = vmatpush2.msra.mxu0 0.0
        %1444 = vmatprep.subr.mxu0 0.0
        %1445 = vmatpush2.msra.mxu0 0.0
        %1446 = vmatprep.subr.mxu0 0.0
        %1447 = vmatpush2.msra.mxu0 0.0
        %1448 = vmatprep.subr.mxu0 0.0
        %1449 = vmatpush2.msra.mxu0 0.0
        %1450 = vmatprep.subr.mxu0 0.0
        %1451 = vmatpush2.msra.mxu0 0.0
        %1452 = vmatprep.subr.mxu0 0.0
        %1453 = vmatpush2.msra.mxu0 0.0
        %1454 = vmatprep.subr.mxu0 0.0
        %1455 = vmatpush2.msra.mxu0 0.0
        %1456 = vmatprep.subr.mxu0 0.0
        %1457 = vmatpush2.msra.mxu0 0.0
        %1458 = vmatprep.subr.mxu0 0.0
        %1459 = vmatpush2.msra.mxu0 0.0
        %1460 = vmatprep.subr.mxu0 0.0
        %1461 = vmatpush2.msra.mxu0 0.0
        %1462 = vmatprep.subr.mxu0 0.0
        %1463 = vmatpush2.msra.mxu0 0.0
        %1464 = vmatprep.subr.mxu0 0.0
        %1465 = vmatpush2.msra.mxu0 0.0
        %1466 = vmatprep.subr.mxu0 0.0
        %1467 = vmatpush2.msra.mxu0 0.0
        %1468 = vmatprep.mubr.f32.mxu0 0.0
        %1469 = vmatmul.mubr.f32.gmra.mxu0 %v1357
        %v1470 = vpop.f32.mrf.mxu0
        %v1471 = vadd.f32 0.0, %v1470
        %v1472 = vpop.f32.mrf.mxu0
        %1473 = vmatprep.mubr.f32.mxu0 0.0
        %1474 = vmatmul.mubr.f32.gmra.mxu0 %v1360
        %v1475 = vpop.f32.mrf.mxu0
        %v1476 = vadd.f32 0.0, %v1475
        %v1477 = vpop.f32.mrf.mxu0
        %1478 = vmatprep.mubr.f32.mxu0 0.0
        %1479 = vmatmul.mubr.f32.gmra.mxu0 %v1363
        %v1480 = vpop.f32.mrf.mxu0
        %v1481 = vadd.f32 0.0, %v1480
        %v1482 = vpop.f32.mrf.mxu0
        %1483 = vmatprep.mubr.f32.mxu0 0.0
        %1484 = vmatmul.mubr.f32.gmra.mxu0 %v1366
        %v1485 = vpop.f32.mrf.mxu0
        %v1486 = vadd.f32 0.0, %v1485
        %v1487 = vpop.f32.mrf.mxu0
        %1488 = vmatprep.mubr.f32.mxu0 0.0
        %1489 = vmatmul.mubr.f32.gmra.mxu0 %v1369
        %v1490 = vpop.f32.mrf.mxu0
        %v1491 = vadd.f32 0.0, %v1490
        %v1492 = vpop.f32.mrf.mxu0
        %1493 = vmatprep.mubr.f32.mxu0 0.0
        %1494 = vmatmul.mubr.f32.gmra.mxu0 %v1372
        %v1495 = vpop.f32.mrf.mxu0
        %v1496 = vadd.f32 0.0, %v1495
        %v1497 = vpop.f32.mrf.mxu0
        %1498 = vmatprep.mubr.f32.mxu0 0.0
        %1499 = vmatmul.mubr.f32.gmra.mxu0 %v1375
        %v1500 = vpop.f32.mrf.mxu0
        %v1501 = vadd.f32 0.0, %v1500
        %v1502 = vpop.f32.mrf.mxu0
        %1503 = vmatprep.mubr.f32.mxu0 0.0
        %1504 = vmatmul.mubr.f32.gmra.mxu0 %v1378
        %v1505 = vpop.f32.mrf.mxu0
        %v1506 = vadd.f32 0.0, %v1505
        %v1507 = vpop.f32.mrf.mxu0
        %1508 = vmatprep.mubr.f32.mxu0 0.0
        %1509 = vmatmul.mubr.f32.gmra.mxu0 %v1381
        %v1510 = vpop.f32.mrf.mxu0
        %v1511 = vadd.f32 0.0, %v1510
        %v1512 = vpop.f32.mrf.mxu0
        %1513 = vmatprep.mubr.f32.mxu0 0.0
        %1514 = vmatmul.mubr.f32.gmra.mxu0 %v1384
        %v1515 = vpop.f32.mrf.mxu0
        %v1516 = vadd.f32 0.0, %v1515
        %v1517 = vpop.f32.mrf.mxu0
        %1518 = vmatprep.mubr.f32.mxu0 0.0
        %1519 = vmatmul.mubr.f32.gmra.mxu0 %v1387
        %v1520 = vpop.f32.mrf.mxu0
        %v1521 = vadd.f32 0.0, %v1520
        %v1522 = vpop.f32.mrf.mxu0
        %1523 = vmatprep.mubr.f32.mxu0 0.0
        %1524 = vmatmul.mubr.f32.gmra.mxu0 %v1390
        %v1525 = vpop.f32.mrf.mxu0
        %v1526 = vadd.f32 0.0, %v1525
        %v1527 = vpop.f32.mrf.mxu0
        %1528 = vmatprep.mubr.f32.mxu0 0.0
        %1529 = vmatmul.mubr.f32.gmra.mxu0 %v1393
        %v1530 = vpop.f32.mrf.mxu0
        %v1531 = vadd.f32 0.0, %v1530
        %v1532 = vpop.f32.mrf.mxu0
        %1533 = vmatprep.mubr.f32.mxu0 0.0
        %1534 = vmatmul.mubr.f32.gmra.mxu0 %v1396
        %v1535 = vpop.f32.mrf.mxu0
        %v1536 = vadd.f32 0.0, %v1535
        %v1537 = vpop.f32.mrf.mxu0
        %1538 = vmatprep.mubr.f32.mxu0 0.0
        %1539 = vmatmul.mubr.f32.gmra.mxu0 %v1399
        %v1540 = vpop.f32.mrf.mxu0
        %v1541 = vadd.f32 0.0, %v1540
        %v1542 = vpop.f32.mrf.mxu0
        %1543 = vmatprep.mubr.f32.mxu0 0.0
        %1544 = vmatmul.mubr.f32.gmra.mxu0 %v1402
        %v1545 = vpop.f32.mrf.mxu0
        %v1546 = vadd.f32 0.0, %v1545
        %v1547 = vpop.f32.mrf.mxu0
        %1548 = vdwg.mxu0
        %v1549 = vld [vmem:[#allocation5] sm:$0xff]
        %v1550 = vld [vmem:[#allocation5 + $0x8] sm:$0xff]
        %v1551 = vld [vmem:[#allocation5 + $0x10] sm:$0xff]
        %v1552 = vld [vmem:[#allocation5 + $0x18] sm:$0xff]
        %v1553 = vld [vmem:[#allocation5 + $0x20] sm:$0xff]
        %v1554 = vld [vmem:[#allocation5 + $0x28] sm:$0xff]
        %v1555 = vld [vmem:[#allocation5 + $0x30] sm:$0xff]
        %v1556 = vld [vmem:[#allocation5 + $0x38] sm:$0xff]
        %v1557 = vld [vmem:[#allocation5 + $0x40] sm:$0xff]
        %v1558 = vld [vmem:[#allocation5 + $0x48] sm:$0xff]
        %v1559 = vld [vmem:[#allocation5 + $0x50] sm:$0xff]
        %v1560 = vld [vmem:[#allocation5 + $0x58] sm:$0xff]
        %v1561 = vld [vmem:[#allocation5 + $0x60] sm:$0xff]
        %v1562 = vld [vmem:[#allocation5 + $0x68] sm:$0xff]
        %v1563 = vld [vmem:[#allocation5 + $0x70] sm:$0xff]
        %v1564 = vld [vmem:[#allocation5 + $0x78] sm:$0xff]
        %1565 = vmin.xlane.f32.xlu0 %v1471
        %v1566 = vpop.xlane.xlu0 %1565
        %1567 = vmin.xlane.f32.xlu0 %v1476
        %v1568 = vpop.xlane.xlu0 %1567
        %1569 = vmin.xlane.f32.xlu0 %v1481
        %v1570 = vpop.xlane.xlu0 %1569
        %1571 = vmin.xlane.f32.xlu0 %v1486
        %v1572 = vpop.xlane.xlu0 %1571
        %1573 = vmin.xlane.f32.xlu0 %v1491
        %v1574 = vpop.xlane.xlu0 %1573
        %1575 = vmin.xlane.f32.xlu0 %v1496
        %v1576 = vpop.xlane.xlu0 %1575
        %1577 = vmin.xlane.f32.xlu0 %v1501
        %v1578 = vpop.xlane.xlu0 %1577
        %1579 = vmin.xlane.f32.xlu0 %v1506
        %v1580 = vpop.xlane.xlu0 %1579
        %1581 = vmin.xlane.f32.xlu0 %v1511
        %v1582 = vpop.xlane.xlu0 %1581
        %1583 = vmin.xlane.f32.xlu0 %v1516
        %v1584 = vpop.xlane.xlu0 %1583
        %1585 = vmin.xlane.f32.xlu0 %v1521
        %v1586 = vpop.xlane.xlu0 %1585
        %1587 = vmin.xlane.f32.xlu0 %v1526
        %v1588 = vpop.xlane.xlu0 %1587
        %1589 = vmin.xlane.f32.xlu0 %v1531
        %v1590 = vpop.xlane.xlu0 %1589
        %1591 = vmin.xlane.f32.xlu0 %v1536
        %v1592 = vpop.xlane.xlu0 %1591
        %1593 = vmin.xlane.f32.xlu0 %v1541
        %v1594 = vpop.xlane.xlu0 %1593
        %1595 = vmin.xlane.f32.xlu0 %v1546
        %v1596 = vpop.xlane.xlu0 %1595
        %v1597 = vmin.f32 %v1549, %v1566
        %v1598 = vmin.f32 %v1550, %v1568
        %v1599 = vmin.f32 %v1551, %v1570
        %v1600 = vmin.f32 %v1552, %v1572
        %v1601 = vmin.f32 %v1553, %v1574
        %v1602 = vmin.f32 %v1554, %v1576
        %v1603 = vmin.f32 %v1555, %v1578
        %v1604 = vmin.f32 %v1556, %v1580
        %v1605 = vmin.f32 %v1557, %v1582
        %v1606 = vmin.f32 %v1558, %v1584
        %v1607 = vmin.f32 %v1559, %v1586
        %v1608 = vmin.f32 %v1560, %v1588
        %v1609 = vmin.f32 %v1561, %v1590
        %v1610 = vmin.f32 %v1562, %v1592
        %v1611 = vmin.f32 %v1563, %v1594
        %v1612 = vmin.f32 %v1564, %v1596
        %vm1613 = vcmask 7168
        %1614 = vst.msk [vmem:[#allocation5] sm:$0xff] %vm1613, %v1597
        %1615 = vst.msk [vmem:[#allocation5 + $0x8] sm:$0xff] %vm1613, %v1598
        %1616 = vst.msk [vmem:[#allocation5 + $0x10] sm:$0xff] %vm1613, %v1599
        %1617 = vst.msk [vmem:[#allocation5 + $0x18] sm:$0xff] %vm1613, %v1600
        %1618 = vst.msk [vmem:[#allocation5 + $0x20] sm:$0xff] %vm1613, %v1601
        %1619 = vst.msk [vmem:[#allocation5 + $0x28] sm:$0xff] %vm1613, %v1602
        %1620 = vst.msk [vmem:[#allocation5 + $0x30] sm:$0xff] %vm1613, %v1603
        %1621 = vst.msk [vmem:[#allocation5 + $0x38] sm:$0xff] %vm1613, %v1604
        %1622 = vst.msk [vmem:[#allocation5 + $0x40] sm:$0xff] %vm1613, %v1605
        %1623 = vst.msk [vmem:[#allocation5 + $0x48] sm:$0xff] %vm1613, %v1606
        %1624 = vst.msk [vmem:[#allocation5 + $0x50] sm:$0xff] %vm1613, %v1607
        %1625 = vst.msk [vmem:[#allocation5 + $0x58] sm:$0xff] %vm1613, %v1608
        %1626 = vst.msk [vmem:[#allocation5 + $0x60] sm:$0xff] %vm1613, %v1609
        %1627 = vst.msk [vmem:[#allocation5 + $0x68] sm:$0xff] %vm1613, %v1610
        %1628 = vst.msk [vmem:[#allocation5 + $0x70] sm:$0xff] %vm1613, %v1611
        %1629 = vst.msk [vmem:[#allocation5 + $0x78] sm:$0xff] %vm1613, %v1612
        %s1630 = scalar_lea.vmem [#allocation6], %s1350
        %v1631 = vld [vmem:[%s1630] sm:$0x1]
        %v1632 = vmin.f32 %v1471, %v1491
        %v1633 = vmin.f32 %v1476, %v1496
        %v1634 = vmin.f32 %v1481, %v1501
        %v1635 = vmin.f32 %v1486, %v1506
        %v1636 = vmin.f32 %v1632, %v1511
        %v1637 = vmin.f32 %v1633, %v1516
        %v1638 = vmin.f32 %v1634, %v1521
        %v1639 = vmin.f32 %v1635, %v1526
        %v1640 = vmin.f32 %v1636, %v1531
        %v1641 = vmin.f32 %v1637, %v1536
        %v1642 = vmin.f32 %v1638, %v1541
        %v1643 = vmin.f32 %v1639, %v1546
        %v1644 = vmin.f32 %v1640, %v1641
        %v1645 = vmin.f32 %v1642, %v1643
        %v1646 = vmin.f32 %v1644, %v1645
        %v1647 = vrot.slane %v1646, 4
        %v1648 = vmin.f32 %v1646, %v1647
        %v1649 = vrot.slane %v1648, 2
        %v1650 = vmin.f32 %v1648, %v1649
        %v1651 = vrot.slane %v1650, 1
        %v1652 = vmin.f32 %v1650, %v1651
        %v1653 = vmin.f32 %v1631, %v1652
        %v1654 = vlaneseq
        %vm1655 = vcmp.ge.s32.totalorder %v1654, 0
        %vm1656 = vcmp.lt.s32.totalorder %v1654, 128
        %vm1657 = vmand %vm1655, %vm1656
        %1658 = vst.msk [vmem:[%s1630] sm:$0x1] %vm1657, %v1653
        %p1659 = scmp.eq.s32.totalorder %s24, 2
        // Predicated region
        $region57: #{point_loss.1} parent=39 // pred_check
          %p1660 = pneg %p1659
        $region58: #{point_loss.1} parent=39 // pred_check_branch
          %1662 = sbr.rel (%p1660) target = $region60
        $region59: #{point_loss.1} parent=39 // pred_region
          %v1663 = vld [vmem:[#allocation7] sm:$0x1]
          %v1664 = vld [vmem:[#allocation3] sm:$0xff]
          %v1665 = vld [vmem:[#allocation3 + $0x8] sm:$0xff]
          %v1666 = vld [vmem:[#allocation3 + $0x10] sm:$0xff]
          %v1667 = vld [vmem:[#allocation3 + $0x18] sm:$0xff]
          %v1668 = vld [vmem:[#allocation3 + $0x20] sm:$0xff]
          %v1669 = vld [vmem:[#allocation3 + $0x28] sm:$0xff]
          %v1670 = vld [vmem:[#allocation3 + $0x30] sm:$0xff]
          %v1671 = vld [vmem:[#allocation3 + $0x38] sm:$0xff]
          %v1672 = vld [vmem:[#allocation3 + $0x40] sm:$0xff]
          %v1673 = vld [vmem:[#allocation3 + $0x48] sm:$0xff]
          %v1674 = vld [vmem:[#allocation3 + $0x50] sm:$0xff]
          %v1675 = vld [vmem:[#allocation3 + $0x58] sm:$0xff]
          %v1676 = vld [vmem:[#allocation3 + $0x60] sm:$0xff]
          %v1677 = vld [vmem:[#allocation3 + $0x68] sm:$0xff]
          %v1678 = vld [vmem:[#allocation3 + $0x70] sm:$0xff]
          %v1679 = vld [vmem:[#allocation3 + $0x78] sm:$0xff]
          %v1680 = vld [vmem:[#allocation5] sm:$0xff]
          %v1681 = vld [vmem:[#allocation5 + $0x8] sm:$0xff]
          %v1682 = vld [vmem:[#allocation5 + $0x10] sm:$0xff]
          %v1683 = vld [vmem:[#allocation5 + $0x18] sm:$0xff]
          %v1684 = vld [vmem:[#allocation5 + $0x20] sm:$0xff]
          %v1685 = vld [vmem:[#allocation5 + $0x28] sm:$0xff]
          %v1686 = vld [vmem:[#allocation5 + $0x30] sm:$0xff]
          %v1687 = vld [vmem:[#allocation5 + $0x38] sm:$0xff]
          %v1688 = vld [vmem:[#allocation5 + $0x40] sm:$0xff]
          %v1689 = vld [vmem:[#allocation5 + $0x48] sm:$0xff]
          %v1690 = vld [vmem:[#allocation5 + $0x50] sm:$0xff]
          %v1691 = vld [vmem:[#allocation5 + $0x58] sm:$0xff]
          %v1692 = vld [vmem:[#allocation5 + $0x60] sm:$0xff]
          %v1693 = vld [vmem:[#allocation5 + $0x68] sm:$0xff]
          %v1694 = vld [vmem:[#allocation5 + $0x70] sm:$0xff]
          %v1695 = vld [vmem:[#allocation5 + $0x78] sm:$0xff]
          %v1696 = vmul.f32 %v1664, %v1680
          %v1697 = vmul.f32 %v1665, %v1681
          %v1698 = vmul.f32 %v1666, %v1682
          %v1699 = vmul.f32 %v1667, %v1683
          %v1700 = vmul.f32 %v1668, %v1684
          %v1701 = vmul.f32 %v1669, %v1685
          %v1702 = vmul.f32 %v1670, %v1686
          %v1703 = vmul.f32 %v1671, %v1687
          %v1704 = vmul.f32 %v1672, %v1688
          %v1705 = vmul.f32 %v1673, %v1689
          %v1706 = vmul.f32 %v1674, %v1690
          %v1707 = vmul.f32 %v1675, %v1691
          %v1708 = vmul.f32 %v1676, %v1692
          %v1709 = vmul.f32 %v1677, %v1693
          %v1710 = vmul.f32 %v1678, %v1694
          %v1711 = vmul.f32 %v1679, %v1695
          %v1712 = vsel %vm1613, %v1696, 0.0
          %v1713 = vsel %vm1613, %v1697, 0.0
          %v1714 = vadd.f32 %v1712, %v1713
          %v1715 = vsel %vm1613, %v1698, 0.0
          %v1716 = vadd.f32 %v1714, %v1715
          %v1717 = vsel %vm1613, %v1699, 0.0
          %v1718 = vadd.f32 %v1716, %v1717
          %v1719 = vsel %vm1613, %v1700, 0.0
          %v1720 = vadd.f32 %v1718, %v1719
          %v1721 = vsel %vm1613, %v1701, 0.0
          %v1722 = vadd.f32 %v1720, %v1721
          %v1723 = vsel %vm1613, %v1702, 0.0
          %v1724 = vadd.f32 %v1722, %v1723
          %v1725 = vsel %vm1613, %v1703, 0.0
          %v1726 = vadd.f32 %v1724, %v1725
          %v1727 = vsel %vm1613, %v1704, 0.0
          %v1728 = vadd.f32 %v1726, %v1727
          %v1729 = vsel %vm1613, %v1705, 0.0
          %v1730 = vadd.f32 %v1728, %v1729
          %v1731 = vsel %vm1613, %v1706, 0.0
          %v1732 = vadd.f32 %v1730, %v1731
          %v1733 = vsel %vm1613, %v1707, 0.0
          %v1734 = vadd.f32 %v1732, %v1733
          %v1735 = vsel %vm1613, %v1708, 0.0
          %v1736 = vadd.f32 %v1734, %v1735
          %v1737 = vsel %vm1613, %v1709, 0.0
          %v1738 = vadd.f32 %v1736, %v1737
          %v1739 = vsel %vm1613, %v1710, 0.0
          %v1740 = vadd.f32 %v1738, %v1739
          %v1741 = vsel %vm1613, %v1711, 0.0
          %v1742 = vadd.f32 %v1740, %v1741
          %1743 = vadd.xlane.f32.xlu0 %v1742
          %v1744 = vpop.xlane.xlu0 %1743
          %v1745 = vrot.slane %v1744, 4
          %v1746 = vadd.f32 %v1744, %v1745
          %v1747 = vrot.slane %v1746, 2
          %v1748 = vadd.f32 %v1746, %v1747
          %v1749 = vrot.slane %v1748, 1
          %v1750 = vadd.f32 %v1748, %v1749
          %s1751 = vtos %v1750
          %v1752 = vstv %s1751
          %v1753 = vadd.f32 %v1663, %v1752
          %vm1754 = vcmask 0
          %1755 = vst.msk [vmem:[#allocation7] sm:$0x1] %vm1754, %v1753
        $region60: #{point_loss.1} parent=39 // pred_fallthru
          _
        %p1756 = scmp.eq.s32.totalorder %s23, 2
        // Predicated region
        $region61: #{point_loss.1} parent=39 // pred_check
          %p1757 = pneg %p1756
        $region62: #{point_loss.1} parent=39 // pred_check_branch
          %1759 = sbr.rel (%p1757) target = $region64
        $region63: #{point_loss.1} parent=39 // pred_region
          %v1760 = vld [vmem:[%s256] sm:$0xff]
          %v1761 = vstv %s257
          %v1762 = vmul.f32 %v1761, %v1760
          %v1763 = vstv %s258
          %v1764 = vmul.f32 %v1763, %v1760
          %v1766 = vrot.slane %v1764, 1
          %v1768 = vadd.f32 %v1762, %v1766
          %v1769 = vstv %s259
          %v1770 = vmul.f32 %v1769, %v1760
          %v1772 = vrot.slane %v1770, 2
          %v1774 = vadd.f32 %v1768, %v1772
          %v1775 = vstv %s260
          %v1776 = vadd.f32 %v1774, %v1775
          %v1777 = vmul.f32 %v1776, -2.0
          %v1778 = vlaneseq
          %v1779 = vand.u32 %v1778, 127
          %v1780 = vstv %s262
          %v1781 = vadd.s32 %v1780, %v1779
          %vm1782 = vcmp.gt.f32.partialorder %v1777, 0.0
          %v1783 = vstv %s261
          %vm1784 = vcmp.lt.s32.totalorder %v1781, %v1783
          %vm1785 = vmand %vm1782, %vm1784
          %v1786 = vld [vmem:[#allocation8] sm:$0x1]
          %v1787 = vsel %vm1785, %v1653, 0.0
          %vm1788 = vcmask 1040384
          %v1789 = vsel %vm1788, %v1787, 0.0
          %1790 = vadd.xlane.f32.xlu0 %v1789
          %v1791 = vpop.xlane.xlu0 %1790
          %v1792 = vrot.slane %v1791, 4
          %v1793 = vadd.f32 %v1791, %v1792
          %v1794 = vrot.slane %v1793, 2
          %v1795 = vadd.f32 %v1793, %v1794
          %v1796 = vrot.slane %v1795, 1
          %v1797 = vadd.f32 %v1795, %v1796
          %s1798 = vtos %v1797
          %v1799 = vstv %s1798
          %v1800 = vadd.f32 %v1786, %v1799
          %vm1801 = vcmask 0
          %1802 = vst.msk [vmem:[#allocation8] sm:$0x1] %vm1801, %v1800
        $region64: #{point_loss.1} parent=39 // pred_fallthru
          _
        %p1803 = pnand %p1756, %p1659
        %p1804 = pneg %p1803
        // Predicated region
        $region65: #{point_loss.1} parent=39 // pred_check
          _
        $region66: #{point_loss.1} parent=39 // pred_check_branch
          %1806 = sbr.rel (%p1803) target = $region68
        $region67: #{point_loss.1} parent=39 // pred_region
          %v1807 = vld [vmem:[#allocation9] sm:$0x1]
          %v1808 = vld [vmem:[#allocation10] sm:$0x1]
          %vm1809 = vcmp.gt.f32.partialorder %v1807, 0.0
          %vm1810 = vcmp.gt.f32.partialorder %v1808, 0.0
          %v1811 = vld [vmem:[#allocation7] sm:$0x1]
          %v1812 = vld [vmem:[#allocation11] sm:$0x1]
          %v1813 = vsel %vm1809, %v1811, %v1812
          %v1814 = vmax.f32 %v1808, 1.0
          %v1815 = vrcp.pop %v1814
          %v1816 = vmul.f32 %v1813, %v1815
          %v1817 = vld [vmem:[#allocation14] sm:$0x1]
          %v1818 = vsel %vm1810, %v1816, %v1817
          %v1819 = vld [vmem:[#allocation8] sm:$0x1]
          %v1820 = vld [vmem:[#allocation13] sm:$0x1]
          %v1821 = vsel %vm1810, %v1819, %v1820
          %v1822 = vmax.f32 %v1807, 1.0
          %v1823 = vrcp.pop %v1822
          %v1824 = vmul.f32 %v1821, %v1823
          %v1825 = vld [vmem:[#allocation12] sm:$0x1]
          %v1826 = vsel %vm1809, %v1824, %v1825
          %v1827 = vmul.f32 %v1818, 0.5
          %v1828 = vmul.f32 %v1826, 0.5
          %v1829 = vadd.f32 %v1827, %v1828
          %v1830 = vmul.f32 %v1829, 100.0
          %vm1831 = vcmask 0
          %1832 = vst.msk [vmem:[#allocation19] sm:$0x1] %vm1831, %v1830
        $region68: #{point_loss.1} parent=39 // pred_fallthru
          _
        // Predicated region
        $region69: #{point_loss.1} parent=39 // pred_check
          %p1833 = pneg %p159
        $region70: #{point_loss.1} parent=39 // pred_check_branch
          %1835 = sbr.rel (%p1833) target = $region72
        $region71: #{point_loss.1} parent=39 // pred_region
          %s1837 = ssub.s32 16, 16
          %1838 = vsyncadd [#allocation17], %s1837
          %s1840 = sshll.u32 [#allocation19], 4
          %s1841 = int_to_ptr.vmem [resolvable:$true] %s1840
          %1843 = dma.vmem_to_hbm [thread:$0]  %s1841, 16, %s5, [#allocation17]
        $region72: #{point_loss.1} parent=39 // pred_fallthru
          _
        // Predicated region
        $region73: #{point_loss.1} parent=39 // pred_check
          %p1844 = pneg %p159
        $region74: #{point_loss.1} parent=39 // pred_check_branch
          %1846 = sbr.rel (%p1844) target = $region76
        $region75: #{point_loss.1} parent=39 // pred_region
          %1847 = dma.done [#allocation17], 16
        $region76: #{point_loss.1} parent=39 // pred_fallthru
          _
      $region40: #{point_loss.1} parent=5 // pred_fallthru
        _
      %p1848 = scmp.le.s32.totalorder 2, %s14
      // Predicated region
      $region77: #{point_loss.1} parent=5 // pred_check
        %p1849 = pneg %p1848
      $region78: #{point_loss.1} parent=5 // pred_check_branch
        %1851 = sbr.rel (%p1849) target = $region80
      $region79: #{point_loss.1} parent=5 // pred_region
        %s1852 = ssub.s32 %s14, 2
      $region80: #{point_loss.1} parent=5 // pred_fallthru
        _
    $region6: #{point_loss.1} parent=1 // loop_footer
      %s18 = sadd.s32 1, %s14
    $region7: #{point_loss.1} parent=1 // loop_footer_branch
      %13 = sbr.rel target = $region3
    $region8: #{point_loss.1} parent=1 // loop_exit
      _
    %1853 = vsyncpa [#allocation17], 1
    %s1854 = scalar_lea.sflag [#allocation17], 1
    %1855 = vsyncpa %s1854, 1
    %1856 = vsyncpa [#allocation18], 1
    %s1857 = scalar_lea.sflag [#allocation18], 1
    %1858 = vsyncpa %s1857, 1

</llo_original>
